<compile_context>
chip_gen: v5e
topology: v5e:2x2
jax: 0.10.0
libtpu: 0.0.40
codegen_flags: <defaults>
</compile_context>

<pallas_src>
import math
import numpy as np
import jax
import jax.numpy as jnp
from jax import lax
from jax.experimental import pallas as pl
from jax.experimental.pallas import tpu as pltpu

# ---------------- small synthetic config (Mamba2Config semantics) ----------------
D_MODEL   = 32
EXPAND    = 2
D_INNER   = EXPAND * D_MODEL                                  # 64
D_HEAD    = 8
N_HEADS   = D_INNER // D_HEAD                                 # 8 (n_heads % 8 == 0 ok)
D_STATE   = 16
N_GROUPS  = 1
D_CONV    = 4
CONV_DIM  = D_INNER + 2 * N_GROUPS * D_STATE                  # 96
D_IN_PROJ = 2 * D_INNER + 2 * N_GROUPS * D_STATE + N_HEADS    # 168
D_FUSED   = CONV_DIM + D_INNER + D_INNER                      # 224  [x|B|C | z | dt_rep]
RMS_EPS   = 1e-5
DT_MIN, DT_MAX, DT_FLOOR = 0.001, 0.1, 1e-4

BATCH = 2
SEQ   = 16

# packed SSM-state layout: (d_state, d_inner) = (16, 64) -> one lane-dense
# (8, 128) vreg with  h_pk[s, p*64 + d] = h[p*8 + s, d]
PK_SUB  = D_STATE // 2        # 8 sublanes
PK_LANE = 2 * D_INNER         # 128 lanes


def _softplus(x):
    # numerically-stable softplus (log1p form), matches F.softplus
    return jnp.maximum(x, 0.0) + jnp.log1p(jnp.exp(-jnp.abs(x)))


# ---------------------------- fused Pallas kernel ----------------------------

def mamba2_fused_kernel(u_ref, w_ref, cw_ref, cb_ref,
                        a_ref, dtb_ref, drep_ref, gnorm_ref, wo_ref,
                        o_ref,
                        dax_scr, hscr):
    # Per-batch fused Mamba2 block (grid axis = batch).
    #   u_ref: (L, d_model)  ->  o_ref: (L, d_model)
    #   dax_scr: (L, 128)      packed dA rows
    #   hscr   : (L, 8, 128)   dBx (packed), overwritten in place with the state history
    L = o_ref.shape[0]
    u = u_ref[...]                                                   # (L, d_model)

    # -------- single fused in-projection: one MXU push instead of five --------
    proj = jnp.dot(u, w_ref[...], preferred_element_type=jnp.float32)  # (L, 224)
    xBC_pre = proj[:, :CONV_DIM]                                     # (L, 96)  x|B|C
    z       = proj[:, CONV_DIM:CONV_DIM + D_INNER]                   # (L, 64)
    dt_raw  = proj[:, CONV_DIM + D_INNER:]                           # (L, 64) head-replicated

    # -------- causal depthwise conv1d + SiLU, one 96-lane pass --------
    w = cw_ref[...]                                                  # (d_conv, 96)
    rows = lax.broadcasted_iota(jnp.int32, (L, CONV_DIM), 0)         # built once (hoisted)
    acc = xBC_pre * w[D_CONV - 1:D_CONV, :] + cb_ref[...]            # current tap + bias
    for k in range(D_CONV - 1):                                      # static unroll, shifted taps
        d = D_CONV - 1 - k
        shifted = jnp.where(rows >= d, pltpu.roll(xBC_pre, shift=d, axis=0), 0.0)
        acc = acc + shifted * w[k:k + 1, :]
    xBC = acc * jax.nn.sigmoid(acc)                                  # SiLU

    x_c = xBC[:, :D_INNER]                                           # (L, 64)
    B_c = xBC[:, D_INNER:D_INNER + D_STATE]                          # (L, 16)
    C_c = xBC[:, D_INNER + D_STATE:]                                 # (L, 16)

    # -------- SSM precompute: transcendentals / broadcasts hoisted off the scan --------
    dt  = _softplus(dt_raw + dtb_ref[...])                           # (L, 64) head-replicated
    dA  = jnp.exp(dt * a_ref[...])                                   # (L, 64)
    dtx = dt * x_c                                                   # (L, 64)

    # packed-layout coefficients (all lane-dense, built in bulk)
    dax_scr[...] = jnp.concatenate([dA, dA], axis=-1)                # (L, 128)
    dtx2 = jnp.concatenate([dtx, dtx], axis=-1)                      # (L, 128)

    def pack_sn(v):   # (L, 16) -> (L, 8, 128);  out[t, s, p*64+d] = v[t, p*8+s]
        lo = jnp.broadcast_to(v[:, 0:PK_SUB, None], (L, PK_SUB, D_INNER))
        hi = jnp.broadcast_to(v[:, PK_SUB:, None], (L, PK_SUB, D_INNER))
        return jnp.concatenate([lo, hi], axis=-1)

    hscr[...] = pack_sn(B_c) * dtx2[:, None, :]                      # dBx, packed (L,8,128)
    C_pk = pack_sn(C_c)                                              # (L, 8, 128)

    # -------- serialized recurrence: one full-vreg state, mul + fma + store per step --------
    def body(t, h):
        h = h * dax_scr[pl.ds(t, 1), :] + hscr[t]                    # (8,128)*(1,128)+(8,128)
        hscr[t] = h                                                  # reuse dBx slot as history
        return h

    lax.fori_loop(0, L, body, jnp.zeros((PK_SUB, PK_LANE), jnp.float32),
                  unroll=True)

    # -------- bulk readout (off the serialized critical path) --------
    y2 = jnp.sum(hscr[...] * C_pk, axis=1)                           # (L, 128)
    y = y2[:, :D_INNER] + y2[:, D_INNER:]                            # un-pack state halves
    y = y + drep_ref[...] * x_c                                      # D skip connection

    # -------- gated RMSNorm (norm_before_gate=False) + out projection --------
    y = y * (z * jax.nn.sigmoid(z))                                  # y * SiLU(z)
    var = jnp.mean(y * y, axis=-1, keepdims=True)
    yn = y * lax.rsqrt(var + RMS_EPS) * gnorm_ref[...]
    o_ref[...] = jnp.dot(yn, wo_ref[...], preferred_element_type=jnp.float32)


# ---------------------------- wrapper ----------------------------

def mamba2_block_forward(u, params):
    """u: (B, L, d_model) -> (B, L, d_model).  Matches Mamba2Block.forward
    (no cache, seq_idx=None, default dt_limit)."""
    assert N_GROUPS == 1
    B_, L, D = u.shape

    # ---- parameter re-packing (tiny, wrapper-side, parameters only) ----
    w_in_t = params["w_in_t"]                                        # (d_model, d_in_proj)
    wz   = w_in_t[:, :D_INNER]
    wxBC = w_in_t[:, D_INNER:D_INNER + CONV_DIM]
    wdt  = jnp.repeat(w_in_t[:, D_INNER + CONV_DIM:], D_HEAD, axis=1)   # (d_model, d_inner)
    w_fused = jnp.concatenate([wxBC, wz, wdt], axis=1)               # (d_model, 224)

    conv_w_t = params["conv_w"].T                                    # (d_conv, conv_dim)
    conv_b   = params["conv_b"][None, :]                             # (1, conv_dim)

    a_rep   = jnp.repeat(-jnp.exp(params["A_log"]), D_HEAD)[None, :] # (1, d_inner)
    dtb_rep = jnp.repeat(params["dt_bias"], D_HEAD)[None, :]         # (1, d_inner)
    d_rep   = jnp.repeat(params["D"], D_HEAD)[None, :]               # (1, d_inner)
    norm_w  = params["norm_w"][None, :]                              # (1, d_inner)
    w_out_t = params["w_out_t"]                                      # (d_inner, d_model)

    full = lambda shape: pl.BlockSpec(shape, lambda b: (0, 0))

    return pl.pallas_call(
        mamba2_fused_kernel,
        grid=(B_,),
        in_specs=[
            pl.BlockSpec((None, L, D), lambda b: (b, 0, 0)),         # u (per-batch block)
            full((D, D_FUSED)),                                      # fused in-proj weight
            full((D_CONV, CONV_DIM)), full((1, CONV_DIM)),           # conv weight / bias
            full((1, D_INNER)), full((1, D_INNER)), full((1, D_INNER)),  # A, dt_bias, D (replicated)
            full((1, D_INNER)),                                      # RMSNorm weight
            full((D_INNER, D)),                                      # out_proj weight^T
        ],
        out_specs=pl.BlockSpec((None, L, D), lambda b: (b, 0, 0)),
        out_shape=jax.ShapeDtypeStruct((B_, L, D), jnp.float32),
        scratch_shapes=[
            pltpu.VMEM((L, PK_LANE), jnp.float32),                   # packed dA rows
            pltpu.VMEM((L, PK_SUB, PK_LANE), jnp.float32),           # dBx -> state history (shared)
        ],
        compiler_params=pltpu.CompilerParams(
            dimension_semantics=("parallel",)),                      # v7x: batch across 2 TCs
    )(u, w_fused, conv_w_t, conv_b, a_rep, dtb_rep, d_rep, norm_w, w_out_t)


# ---------------------------- pure-JAX reference ----------------------------

def reference_forward(u, params):
    B_, L, D = u.shape
    hi = lax.Precision.HIGHEST
    zxbcdt = jnp.matmul(u, params["w_in_t"], precision=hi)
    z, xBC, dt_raw = (zxbcdt[..., :D_INNER],
                      zxbcdt[..., D_INNER:D_INNER + CONV_DIM],
                      zxbcdt[..., D_INNER + CONV_DIM:])
    # causal depthwise conv + SiLU
    xpad = jnp.pad(xBC, ((0, 0), (D_CONV - 1, 0), (0, 0)))
    conv = sum(xpad[:, k:k + L, :] * params["conv_w"][:, k][None, None, :]
               for k in range(D_CONV)) + params["conv_b"][None, None, :]
    xBC = conv * jax.nn.sigmoid(conv)
    x, Bm, Cm = (xBC[..., :D_INNER],
                 xBC[..., D_INNER:D_INNER + D_STATE],
                 xBC[..., D_INNER + D_STATE:])
    dt = _softplus(dt_raw + params["dt_bias"][None, None, :])
    A = -jnp.exp(params["A_log"])
    Dp = params["D"]
    xh = x.reshape(B_, L, N_HEADS, D_HEAD)

    def step(h, inp):
        x_t, dt_t, B_t, C_t = inp
        dA = jnp.exp(dt_t * A[None, :])                              # (B, H)
        dBx = dt_t[..., None, None] * x_t[..., None] * B_t[:, None, None, :]
        h = h * dA[..., None, None] + dBx
        y_t = jnp.einsum("bhpn,bn->bhp", h, C_t, precision=hi) + Dp[None, :, None] * x_t
        return h, y_t

    h0 = jnp.zeros((B_, N_HEADS, D_HEAD, D_STATE), jnp.float32)
    _, ys = lax.scan(step, h0,
                     (xh.transpose(1, 0, 2, 3), dt.transpose(1, 0, 2),
                      Bm.transpose(1, 0, 2), Cm.transpose(1, 0, 2)))
    y = ys.transpose(1, 0, 2, 3).reshape(B_, L, D_INNER)
    y = y * (z * jax.nn.sigmoid(z))
    y = y * lax.rsqrt(jnp.mean(y * y, axis=-1, keepdims=True) + RMS_EPS) * params["norm_w"]
    return jnp.matmul(y, params["w_out_t"], precision=hi)


# ---------------------------- parameter init ----------------------------

def init_params(key):
    ks = jax.random.split(key, 7)
    w_in = jax.random.normal(ks[0], (D_IN_PROJ, D_MODEL), jnp.float32) * 0.02
    conv_w = jax.random.normal(ks[1], (CONV_DIM, D_CONV), jnp.float32) * 0.2
    conv_b = jax.random.normal(ks[2], (CONV_DIM,), jnp.float32) * 0.1
    # dt_bias init as in Mamba2Block.__init__
    dt = jnp.exp(jax.random.uniform(ks[3], (N_HEADS,), jnp.float32)
                 * (math.log(DT_MAX) - math.log(DT_MIN)) + math.log(DT_MIN))
    dt = jnp.maximum(dt, DT_FLOOR)
    dt_bias = dt + jnp.log(-jnp.expm1(-dt))
    A_log = jnp.log(jax.random.uniform(ks[4], (N_HEADS,), jnp.float32,
                                       minval=1.0, maxval=16.0))
    w_out = jax.random.normal(ks[5], (D_MODEL, D_INNER), jnp.float32) * 0.02
    return {
        "w_in_t": w_in.T,                 # (d_model, d_in_proj)
        "conv_w": conv_w,                 # (conv_dim, d_conv)  == conv1d.weight squeezed
        "conv_b": conv_b,                 # (conv_dim,)
        "dt_bias": dt_bias,               # (n_heads,)
        "A_log": A_log,                   # (n_heads,)
        "D": jnp.ones((N_HEADS,), jnp.float32),
        "norm_w": jnp.ones((D_INNER,), jnp.float32),
        "w_out_t": w_out.T,               # (d_inner, d_model)
    }


if __name__ == "__main__":
    key = jax.random.PRNGKey(0)
    pkey, ukey = jax.random.split(key)
    params = init_params(pkey)
    u = jax.random.normal(ukey, (BATCH, SEQ, D_MODEL), jnp.float32)

    fwd = jax.jit(mamba2_block_forward)
    out = jax.block_until_ready(fwd(u, params))

    ref = reference_forward(u, params)
    np.testing.assert_allclose(np.asarray(out), np.asarray(ref), rtol=5e-4, atol=5e-4)

    print("KERNEL_OK")
</pallas_src>

<mosaic_0001>
module attributes {stable_mosaic.version = 11 : i64} {
  func.func @mamba2_fused_kernel(%arg0: i32, %arg1: memref<1x16x32xf32, #tpu.memory_space<vmem>>, %arg2: memref<32x224xf32, #tpu.memory_space<vmem>>, %arg3: memref<4x96xf32, #tpu.memory_space<vmem>>, %arg4: memref<1x96xf32, #tpu.memory_space<vmem>>, %arg5: memref<1x64xf32, #tpu.memory_space<vmem>>, %arg6: memref<1x64xf32, #tpu.memory_space<vmem>>, %arg7: memref<1x64xf32, #tpu.memory_space<vmem>>, %arg8: memref<1x64xf32, #tpu.memory_space<vmem>>, %arg9: memref<64x32xf32, #tpu.memory_space<vmem>>, %arg10: memref<1x16x32xf32, #tpu.memory_space<vmem>>, %arg11: memref<16x128xf32, #tpu.memory_space<vmem>>, %arg12: memref<16x8x128xf32, #tpu.memory_space<vmem>>) attributes {dimension_semantics = [#tpu.dimension_semantics<parallel>], iteration_bounds = array<i64: 2>, scalar_prefetch = 0 : i64, scratch_operands = 2 : i64, tpu.core_type = #tpu.core_type<tc>, window_params = [{transform_indices = @transform_0, window_bounds = array<i64: 1, 16, 32>}, {pipeline_mode = #tpu.pipeline_mode<synchronous>, transform_indices = @transform_1, window_bounds = array<i64: 32, 224>}, {pipeline_mode = #tpu.pipeline_mode<synchronous>, transform_indices = @transform_2, window_bounds = array<i64: 4, 96>}, {pipeline_mode = #tpu.pipeline_mode<synchronous>, transform_indices = @transform_3, window_bounds = array<i64: 1, 96>}, {pipeline_mode = #tpu.pipeline_mode<synchronous>, transform_indices = @transform_4, window_bounds = array<i64: 1, 64>}, {pipeline_mode = #tpu.pipeline_mode<synchronous>, transform_indices = @transform_5, window_bounds = array<i64: 1, 64>}, {pipeline_mode = #tpu.pipeline_mode<synchronous>, transform_indices = @transform_6, window_bounds = array<i64: 1, 64>}, {pipeline_mode = #tpu.pipeline_mode<synchronous>, transform_indices = @transform_7, window_bounds = array<i64: 1, 64>}, {pipeline_mode = #tpu.pipeline_mode<synchronous>, transform_indices = @transform_8, window_bounds = array<i64: 64, 32>}, {transform_indices = @transform_9, window_bounds = array<i64: 1, 16, 32>}]} {
    %c0 = arith.constant 0 : index
    %c0_0 = arith.constant 0 : index
    %c0_1 = arith.constant 0 : index
    %0 = vector.load %arg1[%c0, %c0_0, %c0_1] : memref<1x16x32xf32, #tpu.memory_space<vmem>>, vector<1x16x32xf32>
    %1 = vector.shape_cast %0 : vector<1x16x32xf32> to vector<16x32xf32>
    %c0_2 = arith.constant 0 : index
    %c0_3 = arith.constant 0 : index
    %2 = vector.load %arg2[%c0_2, %c0_3] : memref<32x224xf32, #tpu.memory_space<vmem>>, vector<32x224xf32>
    %cst = arith.constant dense<0.000000e+00> : vector<16x224xf32>
    %3 = tpu.matmul %1, %2, %cst {dimension_numbers = #tpu.dot_dimension_numbers<[1], [0], [0], [1], [0, 0, 1, 1], [], []>} : vector<16x32xf32>, vector<32x224xf32>, vector<16x224xf32> -> vector<16x224xf32>
    %4 = vector.extract_strided_slice %3 {offsets = [0, 0], sizes = [16, 96], strides = [1, 1]} : vector<16x224xf32> to vector<16x96xf32>
    %5 = vector.extract_strided_slice %3 {offsets = [0, 96], sizes = [16, 64], strides = [1, 1]} : vector<16x224xf32> to vector<16x64xf32>
    %6 = vector.extract_strided_slice %3 {offsets = [0, 160], sizes = [16, 64], strides = [1, 1]} : vector<16x224xf32> to vector<16x64xf32>
    %c0_4 = arith.constant 0 : index
    %c0_5 = arith.constant 0 : index
    %7 = vector.load %arg3[%c0_4, %c0_5] : memref<4x96xf32, #tpu.memory_space<vmem>>, vector<4x96xf32>
    %8 = tpu.iota {dimensions = array<i32: 0>} : vector<16x96xi32>
    %9 = vector.extract_strided_slice %7 {offsets = [3, 0], sizes = [1, 96], strides = [1, 1]} : vector<4x96xf32> to vector<1x96xf32>
    %10 = vector.broadcast %9 : vector<1x96xf32> to vector<16x96xf32>
    %11 = arith.mulf %4, %10 : vector<16x96xf32>
    %c0_6 = arith.constant 0 : index
    %c0_7 = arith.constant 0 : index
    %12 = vector.load %arg4[%c0_6, %c0_7] : memref<1x96xf32, #tpu.memory_space<vmem>>, vector<1x96xf32>
    %13 = vector.broadcast %12 : vector<1x96xf32> to vector<16x96xf32>
    %14 = arith.addf %11, %13 : vector<16x96xf32>
    %c3_i32 = arith.constant 3 : i32
    %15 = vector.broadcast %c3_i32 : i32 to vector<16x96xi32>
    %16 = arith.cmpi sge, %8, %15 : vector<16x96xi32>
    %c3_i32_8 = arith.constant 3 : i32
    %17 = tpu.dynamic_rotate %4 by %c3_i32_8 dim 0 : vector<16x96xf32>, i32 -> vector<16x96xf32>
    %cst_9 = arith.constant 0.000000e+00 : f32
    %18 = vector.broadcast %cst_9 : f32 to vector<16x96xf32>
    %19 = arith.select %16, %17, %18 : vector<16x96xi1>, vector<16x96xf32>
    %20 = vector.extract_strided_slice %7 {offsets = [0, 0], sizes = [1, 96], strides = [1, 1]} : vector<4x96xf32> to vector<1x96xf32>
    %21 = vector.broadcast %20 : vector<1x96xf32> to vector<16x96xf32>
    %22 = arith.mulf %19, %21 : vector<16x96xf32>
    %23 = arith.addf %14, %22 : vector<16x96xf32>
    %c2_i32 = arith.constant 2 : i32
    %24 = vector.broadcast %c2_i32 : i32 to vector<16x96xi32>
    %25 = arith.cmpi sge, %8, %24 : vector<16x96xi32>
    %c2_i32_10 = arith.constant 2 : i32
    %26 = tpu.dynamic_rotate %4 by %c2_i32_10 dim 0 : vector<16x96xf32>, i32 -> vector<16x96xf32>
    %cst_11 = arith.constant 0.000000e+00 : f32
    %27 = vector.broadcast %cst_11 : f32 to vector<16x96xf32>
    %28 = arith.select %25, %26, %27 : vector<16x96xi1>, vector<16x96xf32>
    %29 = vector.extract_strided_slice %7 {offsets = [1, 0], sizes = [1, 96], strides = [1, 1]} : vector<4x96xf32> to vector<1x96xf32>
    %30 = vector.broadcast %29 : vector<1x96xf32> to vector<16x96xf32>
    %31 = arith.mulf %28, %30 : vector<16x96xf32>
    %32 = arith.addf %23, %31 : vector<16x96xf32>
    %c1_i32 = arith.constant 1 : i32
    %33 = vector.broadcast %c1_i32 : i32 to vector<16x96xi32>
    %34 = arith.cmpi sge, %8, %33 : vector<16x96xi32>
    %c1_i32_12 = arith.constant 1 : i32
    %35 = tpu.dynamic_rotate %4 by %c1_i32_12 dim 0 : vector<16x96xf32>, i32 -> vector<16x96xf32>
    %cst_13 = arith.constant 0.000000e+00 : f32
    %36 = vector.broadcast %cst_13 : f32 to vector<16x96xf32>
    %37 = arith.select %34, %35, %36 : vector<16x96xi1>, vector<16x96xf32>
    %38 = vector.extract_strided_slice %7 {offsets = [2, 0], sizes = [1, 96], strides = [1, 1]} : vector<4x96xf32> to vector<1x96xf32>
    %39 = vector.broadcast %38 : vector<1x96xf32> to vector<16x96xf32>
    %40 = arith.mulf %37, %39 : vector<16x96xf32>
    %41 = arith.addf %32, %40 : vector<16x96xf32>
    %42 = arith.negf %41 : vector<16x96xf32>
    %43 = math.exp %42 : vector<16x96xf32>
    %cst_14 = arith.constant 1.000000e+00 : f32
    %44 = vector.broadcast %cst_14 : f32 to vector<16x96xf32>
    %45 = arith.addf %44, %43 : vector<16x96xf32>
    %46 = arith.divf %44, %45 : vector<16x96xf32>
    %47 = arith.mulf %41, %46 : vector<16x96xf32>
    %48 = vector.extract_strided_slice %47 {offsets = [0, 0], sizes = [16, 64], strides = [1, 1]} : vector<16x96xf32> to vector<16x64xf32>
    %49 = vector.extract_strided_slice %47 {offsets = [0, 64], sizes = [16, 16], strides = [1, 1]} : vector<16x96xf32> to vector<16x16xf32>
    %50 = vector.extract_strided_slice %47 {offsets = [0, 80], sizes = [16, 16], strides = [1, 1]} : vector<16x96xf32> to vector<16x16xf32>
    %c0_15 = arith.constant 0 : index
    %c0_16 = arith.constant 0 : index
    %51 = vector.load %arg6[%c0_15, %c0_16] : memref<1x64xf32, #tpu.memory_space<vmem>>, vector<1x64xf32>
    %52 = vector.broadcast %51 : vector<1x64xf32> to vector<16x64xf32>
    %53 = arith.addf %6, %52 : vector<16x64xf32>
    %cst_17 = arith.constant 0.000000e+00 : f32
    %54 = vector.broadcast %cst_17 : f32 to vector<16x64xf32>
    %55 = arith.maximumf %53, %54 : vector<16x64xf32>
    %56 = math.absf %53 : vector<16x64xf32>
    %cst_18 = arith.constant 0.000000e+00 : f32
    %57 = vector.broadcast %cst_18 : f32 to vector<16x64xf32>
    %58 = arith.subf %57, %56 : vector<16x64xf32>
    %59 = math.exp %58 : vector<16x64xf32>
    %60 = math.log1p %59 : vector<16x64xf32>
    %61 = arith.addf %55, %60 : vector<16x64xf32>
    %c0_19 = arith.constant 0 : index
    %c0_20 = arith.constant 0 : index
    %62 = vector.load %arg5[%c0_19, %c0_20] : memref<1x64xf32, #tpu.memory_space<vmem>>, vector<1x64xf32>
    %63 = vector.broadcast %62 : vector<1x64xf32> to vector<16x64xf32>
    %64 = arith.mulf %61, %63 : vector<16x64xf32>
    %65 = math.exp %64 : vector<16x64xf32>
    %66 = arith.mulf %61, %48 : vector<16x64xf32>
    %67 = tpu.concatenate %65, %65 in 1 : vector<16x64xf32>, vector<16x64xf32> -> vector<16x128xf32>
    %c0_21 = arith.constant 0 : index
    %c0_22 = arith.constant 0 : index
    %68 = vector.load %arg11[%c0_21, %c0_22] : memref<16x128xf32, #tpu.memory_space<vmem>>, vector<16x128xf32>
    tpu.vector_store %arg11[%c0_21, %c0_22], %67 {strides = array<i32>} : memref<16x128xf32, #tpu.memory_space<vmem>>, vector<16x128xf32>,
    %69 = tpu.concatenate %66, %66 in 1 : vector<16x64xf32>, vector<16x64xf32> -> vector<16x128xf32>
    %70 = vector.extract_strided_slice %49 {offsets = [0, 0], sizes = [16, 8], strides = [1, 1]} : vector<16x16xf32> to vector<16x8xf32>
    %71 = vector.shape_cast %70 : vector<16x8xf32> to vector<16x8x1xf32>
    %72 = vector.shape_cast %71 : vector<16x8x1xf32> to vector<16x8x1xf32>
    %73 = vector.broadcast %72 : vector<16x8x1xf32> to vector<16x8x64xf32>
    %74 = vector.extract_strided_slice %49 {offsets = [0, 8], sizes = [16, 8], strides = [1, 1]} : vector<16x16xf32> to vector<16x8xf32>
    %75 = vector.shape_cast %74 : vector<16x8xf32> to vector<16x8x1xf32>
    %76 = vector.shape_cast %75 : vector<16x8x1xf32> to vector<16x8x1xf32>
    %77 = vector.broadcast %76 : vector<16x8x1xf32> to vector<16x8x64xf32>
    %78 = tpu.concatenate %73, %77 in 2 : vector<16x8x64xf32>, vector<16x8x64xf32> -> vector<16x8x128xf32>
    %79 = vector.shape_cast %69 : vector<16x128xf32> to vector<16x1x128xf32>
    %80 = vector.broadcast %79 : vector<16x1x128xf32> to vector<16x8x128xf32>
    %81 = arith.mulf %78, %80 : vector<16x8x128xf32>
    %c0_23 = arith.constant 0 : index
    %c0_24 = arith.constant 0 : index
    %c0_25 = arith.constant 0 : index
    %82 = vector.load %arg12[%c0_23, %c0_24, %c0_25] : memref<16x8x128xf32, #tpu.memory_space<vmem>>, vector<16x8x128xf32>
    tpu.vector_store %arg12[%c0_23, %c0_24, %c0_25], %81 {strides = array<i32>} : memref<16x8x128xf32, #tpu.memory_space<vmem>>, vector<16x8x128xf32>,
    %83 = vector.extract_strided_slice %50 {offsets = [0, 0], sizes = [16, 8], strides = [1, 1]} : vector<16x16xf32> to vector<16x8xf32>
    %84 = vector.shape_cast %83 : vector<16x8xf32> to vector<16x8x1xf32>
    %85 = vector.shape_cast %84 : vector<16x8x1xf32> to vector<16x8x1xf32>
    %86 = vector.broadcast %85 : vector<16x8x1xf32> to vector<16x8x64xf32>
    %87 = vector.extract_strided_slice %50 {offsets = [0, 8], sizes = [16, 8], strides = [1, 1]} : vector<16x16xf32> to vector<16x8xf32>
    %88 = vector.shape_cast %87 : vector<16x8xf32> to vector<16x8x1xf32>
    %89 = vector.shape_cast %88 : vector<16x8x1xf32> to vector<16x8x1xf32>
    %90 = vector.broadcast %89 : vector<16x8x1xf32> to vector<16x8x64xf32>
    %91 = tpu.concatenate %86, %90 in 2 : vector<16x8x64xf32>, vector<16x8x64xf32> -> vector<16x8x128xf32>
    %cst_26 = arith.constant 0.000000e+00 : f32
    %92 = vector.broadcast %cst_26 : f32 to vector<8x128xf32>
    %c0_i32 = arith.constant 0 : i32
    %93 = arith.index_cast %c0_i32 : i32 to index
    %c0_27 = arith.constant 0 : index
    %94 = vector.load %arg11[%93, %c0_27] : memref<16x128xf32, #tpu.memory_space<vmem>>, vector<1x128xf32>
    %95 = vector.broadcast %94 : vector<1x128xf32> to vector<8x128xf32>
    %96 = arith.mulf %92, %95 : vector<8x128xf32>
    %97 = arith.index_cast %c0_i32 : i32 to index
    %c0_28 = arith.constant 0 : index
    %c0_29 = arith.constant 0 : index
    %98 = vector.load %arg12[%97, %c0_28, %c0_29] : memref<16x8x128xf32, #tpu.memory_space<vmem>>, vector<1x8x128xf32>
    %99 = vector.shape_cast %98 : vector<1x8x128xf32> to vector<8x128xf32>
    %100 = arith.addf %96, %99 : vector<8x128xf32>
    %101 = arith.index_cast %c0_i32 : i32 to index
    %c0_30 = arith.constant 0 : index
    %c0_31 = arith.constant 0 : index
    %102 = vector.load %arg12[%101, %c0_30, %c0_31] : memref<16x8x128xf32, #tpu.memory_space<vmem>>, vector<1x8x128xf32>
    %103 = vector.shape_cast %102 : vector<1x8x128xf32> to vector<8x128xf32>
    %104 = vector.shape_cast %100 : vector<8x128xf32> to vector<1x8x128xf32>
    tpu.vector_store %arg12[%101, %c0_30, %c0_31], %104 {strides = array<i32>} : memref<16x8x128xf32, #tpu.memory_space<vmem>>, vector<1x8x128xf32>,
    %c1_i32_32 = arith.constant 1 : i32
    %105 = arith.index_cast %c1_i32_32 : i32 to index
    %c0_33 = arith.constant 0 : index
    %106 = vector.load %arg11[%105, %c0_33] : memref<16x128xf32, #tpu.memory_space<vmem>>, vector<1x128xf32>
    %107 = vector.broadcast %106 : vector<1x128xf32> to vector<8x128xf32>
    %108 = arith.mulf %100, %107 : vector<8x128xf32>
    %109 = arith.index_cast %c1_i32_32 : i32 to index
    %c0_34 = arith.constant 0 : index
    %c0_35 = arith.constant 0 : index
    %110 = vector.load %arg12[%109, %c0_34, %c0_35] : memref<16x8x128xf32, #tpu.memory_space<vmem>>, vector<1x8x128xf32>
    %111 = vector.shape_cast %110 : vector<1x8x128xf32> to vector<8x128xf32>
    %112 = arith.addf %108, %111 : vector<8x128xf32>
    %113 = arith.index_cast %c1_i32_32 : i32 to index
    %c0_36 = arith.constant 0 : index
    %c0_37 = arith.constant 0 : index
    %114 = vector.load %arg12[%113, %c0_36, %c0_37] : memref<16x8x128xf32, #tpu.memory_space<vmem>>, vector<1x8x128xf32>
    %115 = vector.shape_cast %114 : vector<1x8x128xf32> to vector<8x128xf32>
    %116 = vector.shape_cast %112 : vector<8x128xf32> to vector<1x8x128xf32>
    tpu.vector_store %arg12[%113, %c0_36, %c0_37], %116 {strides = array<i32>} : memref<16x8x128xf32, #tpu.memory_space<vmem>>, vector<1x8x128xf32>,
    %c2_i32_38 = arith.constant 2 : i32
    %117 = arith.index_cast %c2_i32_38 : i32 to index
    %c0_39 = arith.constant 0 : index
    %118 = vector.load %arg11[%117, %c0_39] : memref<16x128xf32, #tpu.memory_space<vmem>>, vector<1x128xf32>
    %119 = vector.broadcast %118 : vector<1x128xf32> to vector<8x128xf32>
    %120 = arith.mulf %112, %119 : vector<8x128xf32>
    %121 = arith.index_cast %c2_i32_38 : i32 to index
    %c0_40 = arith.constant 0 : index
    %c0_41 = arith.constant 0 : index
    %122 = vector.load %arg12[%121, %c0_40, %c0_41] : memref<16x8x128xf32, #tpu.memory_space<vmem>>, vector<1x8x128xf32>
    %123 = vector.shape_cast %122 : vector<1x8x128xf32> to vector<8x128xf32>
    %124 = arith.addf %120, %123 : vector<8x128xf32>
    %125 = arith.index_cast %c2_i32_38 : i32 to index
    %c0_42 = arith.constant 0 : index
    %c0_43 = arith.constant 0 : index
    %126 = vector.load %arg12[%125, %c0_42, %c0_43] : memref<16x8x128xf32, #tpu.memory_space<vmem>>, vector<1x8x128xf32>
    %127 = vector.shape_cast %126 : vector<1x8x128xf32> to vector<8x128xf32>
    %128 = vector.shape_cast %124 : vector<8x128xf32> to vector<1x8x128xf32>
    tpu.vector_store %arg12[%125, %c0_42, %c0_43], %128 {strides = array<i32>} : memref<16x8x128xf32, #tpu.memory_space<vmem>>, vector<1x8x128xf32>,
    %c3_i32_44 = arith.constant 3 : i32
    %129 = arith.index_cast %c3_i32_44 : i32 to index
    %c0_45 = arith.constant 0 : index
    %130 = vector.load %arg11[%129, %c0_45] : memref<16x128xf32, #tpu.memory_space<vmem>>, vector<1x128xf32>
    %131 = vector.broadcast %130 : vector<1x128xf32> to vector<8x128xf32>
    %132 = arith.mulf %124, %131 : vector<8x128xf32>
    %133 = arith.index_cast %c3_i32_44 : i32 to index
    %c0_46 = arith.constant 0 : index
    %c0_47 = arith.constant 0 : index
    %134 = vector.load %arg12[%133, %c0_46, %c0_47] : memref<16x8x128xf32, #tpu.memory_space<vmem>>, vector<1x8x128xf32>
    %135 = vector.shape_cast %134 : vector<1x8x128xf32> to vector<8x128xf32>
    %136 = arith.addf %132, %135 : vector<8x128xf32>
    %137 = arith.index_cast %c3_i32_44 : i32 to index
    %c0_48 = arith.constant 0 : index
    %c0_49 = arith.constant 0 : index
    %138 = vector.load %arg12[%137, %c0_48, %c0_49] : memref<16x8x128xf32, #tpu.memory_space<vmem>>, vector<1x8x128xf32>
    %139 = vector.shape_cast %138 : vector<1x8x128xf32> to vector<8x128xf32>
    %140 = vector.shape_cast %136 : vector<8x128xf32> to vector<1x8x128xf32>
    tpu.vector_store %arg12[%137, %c0_48, %c0_49], %140 {strides = array<i32>} : memref<16x8x128xf32, #tpu.memory_space<vmem>>, vector<1x8x128xf32>,
    %c4_i32 = arith.constant 4 : i32
    %141 = arith.index_cast %c4_i32 : i32 to index
    %c0_50 = arith.constant 0 : index
    %142 = vector.load %arg11[%141, %c0_50] : memref<16x128xf32, #tpu.memory_space<vmem>>, vector<1x128xf32>
    %143 = vector.broadcast %142 : vector<1x128xf32> to vector<8x128xf32>
    %144 = arith.mulf %136, %143 : vector<8x128xf32>
    %145 = arith.index_cast %c4_i32 : i32 to index
    %c0_51 = arith.constant 0 : index
    %c0_52 = arith.constant 0 : index
    %146 = vector.load %arg12[%145, %c0_51, %c0_52] : memref<16x8x128xf32, #tpu.memory_space<vmem>>, vector<1x8x128xf32>
    %147 = vector.shape_cast %146 : vector<1x8x128xf32> to vector<8x128xf32>
    %148 = arith.addf %144, %147 : vector<8x128xf32>
    %149 = arith.index_cast %c4_i32 : i32 to index
    %c0_53 = arith.constant 0 : index
    %c0_54 = arith.constant 0 : index
    %150 = vector.load %arg12[%149, %c0_53, %c0_54] : memref<16x8x128xf32, #tpu.memory_space<vmem>>, vector<1x8x128xf32>
    %151 = vector.shape_cast %150 : vector<1x8x128xf32> to vector<8x128xf32>
    %152 = vector.shape_cast %148 : vector<8x128xf32> to vector<1x8x128xf32>
    tpu.vector_store %arg12[%149, %c0_53, %c0_54], %152 {strides = array<i32>} : memref<16x8x128xf32, #tpu.memory_space<vmem>>, vector<1x8x128xf32>,
    %c5_i32 = arith.constant 5 : i32
    %153 = arith.index_cast %c5_i32 : i32 to index
    %c0_55 = arith.constant 0 : index
    %154 = vector.load %arg11[%153, %c0_55] : memref<16x128xf32, #tpu.memory_space<vmem>>, vector<1x128xf32>
    %155 = vector.broadcast %154 : vector<1x128xf32> to vector<8x128xf32>
    %156 = arith.mulf %148, %155 : vector<8x128xf32>
    %157 = arith.index_cast %c5_i32 : i32 to index
    %c0_56 = arith.constant 0 : index
    %c0_57 = arith.constant 0 : index
    %158 = vector.load %arg12[%157, %c0_56, %c0_57] : memref<16x8x128xf32, #tpu.memory_space<vmem>>, vector<1x8x128xf32>
    %159 = vector.shape_cast %158 : vector<1x8x128xf32> to vector<8x128xf32>
    %160 = arith.addf %156, %159 : vector<8x128xf32>
    %161 = arith.index_cast %c5_i32 : i32 to index
    %c0_58 = arith.constant 0 : index
    %c0_59 = arith.constant 0 : index
    %162 = vector.load %arg12[%161, %c0_58, %c0_59] : memref<16x8x128xf32, #tpu.memory_space<vmem>>, vector<1x8x128xf32>
    %163 = vector.shape_cast %162 : vector<1x8x128xf32> to vector<8x128xf32>
    %164 = vector.shape_cast %160 : vector<8x128xf32> to vector<1x8x128xf32>
    tpu.vector_store %arg12[%161, %c0_58, %c0_59], %164 {strides = array<i32>} : memref<16x8x128xf32, #tpu.memory_space<vmem>>, vector<1x8x128xf32>,
    %c6_i32 = arith.constant 6 : i32
    %165 = arith.index_cast %c6_i32 : i32 to index
    %c0_60 = arith.constant 0 : index
    %166 = vector.load %arg11[%165, %c0_60] : memref<16x128xf32, #tpu.memory_space<vmem>>, vector<1x128xf32>
    %167 = vector.broadcast %166 : vector<1x128xf32> to vector<8x128xf32>
    %168 = arith.mulf %160, %167 : vector<8x128xf32>
    %169 = arith.index_cast %c6_i32 : i32 to index
    %c0_61 = arith.constant 0 : index
    %c0_62 = arith.constant 0 : index
    %170 = vector.load %arg12[%169, %c0_61, %c0_62] : memref<16x8x128xf32, #tpu.memory_space<vmem>>, vector<1x8x128xf32>
    %171 = vector.shape_cast %170 : vector<1x8x128xf32> to vector<8x128xf32>
    %172 = arith.addf %168, %171 : vector<8x128xf32>
    %173 = arith.index_cast %c6_i32 : i32 to index
    %c0_63 = arith.constant 0 : index
    %c0_64 = arith.constant 0 : index
    %174 = vector.load %arg12[%173, %c0_63, %c0_64] : memref<16x8x128xf32, #tpu.memory_space<vmem>>, vector<1x8x128xf32>
    %175 = vector.shape_cast %174 : vector<1x8x128xf32> to vector<8x128xf32>
    %176 = vector.shape_cast %172 : vector<8x128xf32> to vector<1x8x128xf32>
    tpu.vector_store %arg12[%173, %c0_63, %c0_64], %176 {strides = array<i32>} : memref<16x8x128xf32, #tpu.memory_space<vmem>>, vector<1x8x128xf32>,
    %c7_i32 = arith.constant 7 : i32
    %177 = arith.index_cast %c7_i32 : i32 to index
    %c0_65 = arith.constant 0 : index
    %178 = vector.load %arg11[%177, %c0_65] : memref<16x128xf32, #tpu.memory_space<vmem>>, vector<1x128xf32>
    %179 = vector.broadcast %178 : vector<1x128xf32> to vector<8x128xf32>
    %180 = arith.mulf %172, %179 : vector<8x128xf32>
    %181 = arith.index_cast %c7_i32 : i32 to index
    %c0_66 = arith.constant 0 : index
    %c0_67 = arith.constant 0 : index
    %182 = vector.load %arg12[%181, %c0_66, %c0_67] : memref<16x8x128xf32, #tpu.memory_space<vmem>>, vector<1x8x128xf32>
    %183 = vector.shape_cast %182 : vector<1x8x128xf32> to vector<8x128xf32>
    %184 = arith.addf %180, %183 : vector<8x128xf32>
    %185 = arith.index_cast %c7_i32 : i32 to index
    %c0_68 = arith.constant 0 : index
    %c0_69 = arith.constant 0 : index
    %186 = vector.load %arg12[%185, %c0_68, %c0_69] : memref<16x8x128xf32, #tpu.memory_space<vmem>>, vector<1x8x128xf32>
    %187 = vector.shape_cast %186 : vector<1x8x128xf32> to vector<8x128xf32>
    %188 = vector.shape_cast %184 : vector<8x128xf32> to vector<1x8x128xf32>
    tpu.vector_store %arg12[%185, %c0_68, %c0_69], %188 {strides = array<i32>} : memref<16x8x128xf32, #tpu.memory_space<vmem>>, vector<1x8x128xf32>,
    %c8_i32 = arith.constant 8 : i32
    %189 = arith.index_cast %c8_i32 : i32 to index
    %c0_70 = arith.constant 0 : index
    %190 = vector.load %arg11[%189, %c0_70] : memref<16x128xf32, #tpu.memory_space<vmem>>, vector<1x128xf32>
    %191 = vector.broadcast %190 : vector<1x128xf32> to vector<8x128xf32>
    %192 = arith.mulf %184, %191 : vector<8x128xf32>
    %193 = arith.index_cast %c8_i32 : i32 to index
    %c0_71 = arith.constant 0 : index
    %c0_72 = arith.constant 0 : index
    %194 = vector.load %arg12[%193, %c0_71, %c0_72] : memref<16x8x128xf32, #tpu.memory_space<vmem>>, vector<1x8x128xf32>
    %195 = vector.shape_cast %194 : vector<1x8x128xf32> to vector<8x128xf32>
    %196 = arith.addf %192, %195 : vector<8x128xf32>
    %197 = arith.index_cast %c8_i32 : i32 to index
    %c0_73 = arith.constant 0 : index
    %c0_74 = arith.constant 0 : index
    %198 = vector.load %arg12[%197, %c0_73, %c0_74] : memref<16x8x128xf32, #tpu.memory_space<vmem>>, vector<1x8x128xf32>
    %199 = vector.shape_cast %198 : vector<1x8x128xf32> to vector<8x128xf32>
    %200 = vector.shape_cast %196 : vector<8x128xf32> to vector<1x8x128xf32>
    tpu.vector_store %arg12[%197, %c0_73, %c0_74], %200 {strides = array<i32>} : memref<16x8x128xf32, #tpu.memory_space<vmem>>, vector<1x8x128xf32>,
    %c9_i32 = arith.constant 9 : i32
    %201 = arith.index_cast %c9_i32 : i32 to index
    %c0_75 = arith.constant 0 : index
    %202 = vector.load %arg11[%201, %c0_75] : memref<16x128xf32, #tpu.memory_space<vmem>>, vector<1x128xf32>
    %203 = vector.broadcast %202 : vector<1x128xf32> to vector<8x128xf32>
    %204 = arith.mulf %196, %203 : vector<8x128xf32>
    %205 = arith.index_cast %c9_i32 : i32 to index
    %c0_76 = arith.constant 0 : index
    %c0_77 = arith.constant 0 : index
    %206 = vector.load %arg12[%205, %c0_76, %c0_77] : memref<16x8x128xf32, #tpu.memory_space<vmem>>, vector<1x8x128xf32>
    %207 = vector.shape_cast %206 : vector<1x8x128xf32> to vector<8x128xf32>
    %208 = arith.addf %204, %207 : vector<8x128xf32>
    %209 = arith.index_cast %c9_i32 : i32 to index
    %c0_78 = arith.constant 0 : index
    %c0_79 = arith.constant 0 : index
    %210 = vector.load %arg12[%209, %c0_78, %c0_79] : memref<16x8x128xf32, #tpu.memory_space<vmem>>, vector<1x8x128xf32>
    %211 = vector.shape_cast %210 : vector<1x8x128xf32> to vector<8x128xf32>
    %212 = vector.shape_cast %208 : vector<8x128xf32> to vector<1x8x128xf32>
    tpu.vector_store %arg12[%209, %c0_78, %c0_79], %212 {strides = array<i32>} : memref<16x8x128xf32, #tpu.memory_space<vmem>>, vector<1x8x128xf32>,
    %c10_i32 = arith.constant 10 : i32
    %213 = arith.index_cast %c10_i32 : i32 to index
    %c0_80 = arith.constant 0 : index
    %214 = vector.load %arg11[%213, %c0_80] : memref<16x128xf32, #tpu.memory_space<vmem>>, vector<1x128xf32>
    %215 = vector.broadcast %214 : vector<1x128xf32> to vector<8x128xf32>
    %216 = arith.mulf %208, %215 : vector<8x128xf32>
    %217 = arith.index_cast %c10_i32 : i32 to index
    %c0_81 = arith.constant 0 : index
    %c0_82 = arith.constant 0 : index
    %218 = vector.load %arg12[%217, %c0_81, %c0_82] : memref<16x8x128xf32, #tpu.memory_space<vmem>>, vector<1x8x128xf32>
    %219 = vector.shape_cast %218 : vector<1x8x128xf32> to vector<8x128xf32>
    %220 = arith.addf %216, %219 : vector<8x128xf32>
    %221 = arith.index_cast %c10_i32 : i32 to index
    %c0_83 = arith.constant 0 : index
    %c0_84 = arith.constant 0 : index
    %222 = vector.load %arg12[%221, %c0_83, %c0_84] : memref<16x8x128xf32, #tpu.memory_space<vmem>>, vector<1x8x128xf32>
    %223 = vector.shape_cast %222 : vector<1x8x128xf32> to vector<8x128xf32>
    %224 = vector.shape_cast %220 : vector<8x128xf32> to vector<1x8x128xf32>
    tpu.vector_store %arg12[%221, %c0_83, %c0_84], %224 {strides = array<i32>} : memref<16x8x128xf32, #tpu.memory_space<vmem>>, vector<1x8x128xf32>,
    %c11_i32 = arith.constant 11 : i32
    %225 = arith.index_cast %c11_i32 : i32 to index
    %c0_85 = arith.constant 0 : index
    %226 = vector.load %arg11[%225, %c0_85] : memref<16x128xf32, #tpu.memory_space<vmem>>, vector<1x128xf32>
    %227 = vector.broadcast %226 : vector<1x128xf32> to vector<8x128xf32>
    %228 = arith.mulf %220, %227 : vector<8x128xf32>
    %229 = arith.index_cast %c11_i32 : i32 to index
    %c0_86 = arith.constant 0 : index
    %c0_87 = arith.constant 0 : index
    %230 = vector.load %arg12[%229, %c0_86, %c0_87] : memref<16x8x128xf32, #tpu.memory_space<vmem>>, vector<1x8x128xf32>
    %231 = vector.shape_cast %230 : vector<1x8x128xf32> to vector<8x128xf32>
    %232 = arith.addf %228, %231 : vector<8x128xf32>
    %233 = arith.index_cast %c11_i32 : i32 to index
    %c0_88 = arith.constant 0 : index
    %c0_89 = arith.constant 0 : index
    %234 = vector.load %arg12[%233, %c0_88, %c0_89] : memref<16x8x128xf32, #tpu.memory_space<vmem>>, vector<1x8x128xf32>
    %235 = vector.shape_cast %234 : vector<1x8x128xf32> to vector<8x128xf32>
    %236 = vector.shape_cast %232 : vector<8x128xf32> to vector<1x8x128xf32>
    tpu.vector_store %arg12[%233, %c0_88, %c0_89], %236 {strides = array<i32>} : memref<16x8x128xf32, #tpu.memory_space<vmem>>, vector<1x8x128xf32>,
    %c12_i32 = arith.constant 12 : i32
    %237 = arith.index_cast %c12_i32 : i32 to index
    %c0_90 = arith.constant 0 : index
    %238 = vector.load %arg11[%237, %c0_90] : memref<16x128xf32, #tpu.memory_space<vmem>>, vector<1x128xf32>
    %239 = vector.broadcast %238 : vector<1x128xf32> to vector<8x128xf32>
    %240 = arith.mulf %232, %239 : vector<8x128xf32>
    %241 = arith.index_cast %c12_i32 : i32 to index
    %c0_91 = arith.constant 0 : index
    %c0_92 = arith.constant 0 : index
    %242 = vector.load %arg12[%241, %c0_91, %c0_92] : memref<16x8x128xf32, #tpu.memory_space<vmem>>, vector<1x8x128xf32>
    %243 = vector.shape_cast %242 : vector<1x8x128xf32> to vector<8x128xf32>
    %244 = arith.addf %240, %243 : vector<8x128xf32>
    %245 = arith.index_cast %c12_i32 : i32 to index
    %c0_93 = arith.constant 0 : index
    %c0_94 = arith.constant 0 : index
    %246 = vector.load %arg12[%245, %c0_93, %c0_94] : memref<16x8x128xf32, #tpu.memory_space<vmem>>, vector<1x8x128xf32>
    %247 = vector.shape_cast %246 : vector<1x8x128xf32> to vector<8x128xf32>
    %248 = vector.shape_cast %244 : vector<8x128xf32> to vector<1x8x128xf32>
    tpu.vector_store %arg12[%245, %c0_93, %c0_94], %248 {strides = array<i32>} : memref<16x8x128xf32, #tpu.memory_space<vmem>>, vector<1x8x128xf32>,
    %c13_i32 = arith.constant 13 : i32
    %249 = arith.index_cast %c13_i32 : i32 to index
    %c0_95 = arith.constant 0 : index
    %250 = vector.load %arg11[%249, %c0_95] : memref<16x128xf32, #tpu.memory_space<vmem>>, vector<1x128xf32>
    %251 = vector.broadcast %250 : vector<1x128xf32> to vector<8x128xf32>
    %252 = arith.mulf %244, %251 : vector<8x128xf32>
    %253 = arith.index_cast %c13_i32 : i32 to index
    %c0_96 = arith.constant 0 : index
    %c0_97 = arith.constant 0 : index
    %254 = vector.load %arg12[%253, %c0_96, %c0_97] : memref<16x8x128xf32, #tpu.memory_space<vmem>>, vector<1x8x128xf32>
    %255 = vector.shape_cast %254 : vector<1x8x128xf32> to vector<8x128xf32>
    %256 = arith.addf %252, %255 : vector<8x128xf32>
    %257 = arith.index_cast %c13_i32 : i32 to index
    %c0_98 = arith.constant 0 : index
    %c0_99 = arith.constant 0 : index
    %258 = vector.load %arg12[%257, %c0_98, %c0_99] : memref<16x8x128xf32, #tpu.memory_space<vmem>>, vector<1x8x128xf32>
    %259 = vector.shape_cast %258 : vector<1x8x128xf32> to vector<8x128xf32>
    %260 = vector.shape_cast %256 : vector<8x128xf32> to vector<1x8x128xf32>
    tpu.vector_store %arg12[%257, %c0_98, %c0_99], %260 {strides = array<i32>} : memref<16x8x128xf32, #tpu.memory_space<vmem>>, vector<1x8x128xf32>,
    %c14_i32 = arith.constant 14 : i32
    %261 = arith.index_cast %c14_i32 : i32 to index
    %c0_100 = arith.constant 0 : index
    %262 = vector.load %arg11[%261, %c0_100] : memref<16x128xf32, #tpu.memory_space<vmem>>, vector<1x128xf32>
    %263 = vector.broadcast %262 : vector<1x128xf32> to vector<8x128xf32>
    %264 = arith.mulf %256, %263 : vector<8x128xf32>
    %265 = arith.index_cast %c14_i32 : i32 to index
    %c0_101 = arith.constant 0 : index
    %c0_102 = arith.constant 0 : index
    %266 = vector.load %arg12[%265, %c0_101, %c0_102] : memref<16x8x128xf32, #tpu.memory_space<vmem>>, vector<1x8x128xf32>
    %267 = vector.shape_cast %266 : vector<1x8x128xf32> to vector<8x128xf32>
    %268 = arith.addf %264, %267 : vector<8x128xf32>
    %269 = arith.index_cast %c14_i32 : i32 to index
    %c0_103 = arith.constant 0 : index
    %c0_104 = arith.constant 0 : index
    %270 = vector.load %arg12[%269, %c0_103, %c0_104] : memref<16x8x128xf32, #tpu.memory_space<vmem>>, vector<1x8x128xf32>
    %271 = vector.shape_cast %270 : vector<1x8x128xf32> to vector<8x128xf32>
    %272 = vector.shape_cast %268 : vector<8x128xf32> to vector<1x8x128xf32>
    tpu.vector_store %arg12[%269, %c0_103, %c0_104], %272 {strides = array<i32>} : memref<16x8x128xf32, #tpu.memory_space<vmem>>, vector<1x8x128xf32>,
    %c15_i32 = arith.constant 15 : i32
    %273 = arith.index_cast %c15_i32 : i32 to index
    %c0_105 = arith.constant 0 : index
    %274 = vector.load %arg11[%273, %c0_105] : memref<16x128xf32, #tpu.memory_space<vmem>>, vector<1x128xf32>
    %275 = vector.broadcast %274 : vector<1x128xf32> to vector<8x128xf32>
    %276 = arith.mulf %268, %275 : vector<8x128xf32>
    %277 = arith.index_cast %c15_i32 : i32 to index
    %c0_106 = arith.constant 0 : index
    %c0_107 = arith.constant 0 : index
    %278 = vector.load %arg12[%277, %c0_106, %c0_107] : memref<16x8x128xf32, #tpu.memory_space<vmem>>, vector<1x8x128xf32>
    %279 = vector.shape_cast %278 : vector<1x8x128xf32> to vector<8x128xf32>
    %280 = arith.addf %276, %279 : vector<8x128xf32>
    %281 = arith.index_cast %c15_i32 : i32 to index
    %c0_108 = arith.constant 0 : index
    %c0_109 = arith.constant 0 : index
    %282 = vector.load %arg12[%281, %c0_108, %c0_109] : memref<16x8x128xf32, #tpu.memory_space<vmem>>, vector<1x8x128xf32>
    %283 = vector.shape_cast %282 : vector<1x8x128xf32> to vector<8x128xf32>
    %284 = vector.shape_cast %280 : vector<8x128xf32> to vector<1x8x128xf32>
    tpu.vector_store %arg12[%281, %c0_108, %c0_109], %284 {strides = array<i32>} : memref<16x8x128xf32, #tpu.memory_space<vmem>>, vector<1x8x128xf32>,
    %c16_i32 = arith.constant 16 : i32
    %c0_110 = arith.constant 0 : index
    %c0_111 = arith.constant 0 : index
    %c0_112 = arith.constant 0 : index
    %285 = vector.load %arg12[%c0_110, %c0_111, %c0_112] : memref<16x8x128xf32, #tpu.memory_space<vmem>>, vector<16x8x128xf32>
    %286 = arith.mulf %285, %91 : vector<16x8x128xf32>
    %cst_113 = arith.constant dense<0.000000e+00> : vector<16x128xf32>
    %287 = vector.multi_reduction <add>, %286, %cst_113 [1] : vector<16x8x128xf32> to vector<16x128xf32>
    %288 = vector.extract_strided_slice %287 {offsets = [0, 0], sizes = [16, 64], strides = [1, 1]} : vector<16x128xf32> to vector<16x64xf32>
    %289 = vector.extract_strided_slice %287 {offsets = [0, 64], sizes = [16, 64], strides = [1, 1]} : vector<16x128xf32> to vector<16x64xf32>
    %290 = arith.addf %288, %289 : vector<16x64xf32>
    %c0_114 = arith.constant 0 : index
    %c0_115 = arith.constant 0 : index
    %291 = vector.load %arg7[%c0_114, %c0_115] : memref<1x64xf32, #tpu.memory_space<vmem>>, vector<1x64xf32>
    %292 = vector.broadcast %291 : vector<1x64xf32> to vector<16x64xf32>
    %293 = arith.mulf %292, %48 : vector<16x64xf32>
    %294 = arith.addf %290, %293 : vector<16x64xf32>
    %295 = arith.negf %5 : vector<16x64xf32>
    %296 = math.exp %295 : vector<16x64xf32>
    %cst_116 = arith.constant 1.000000e+00 : f32
    %297 = vector.broadcast %cst_116 : f32 to vector<16x64xf32>
    %298 = arith.addf %297, %296 : vector<16x64xf32>
    %299 = arith.divf %297, %298 : vector<16x64xf32>
    %300 = arith.mulf %5, %299 : vector<16x64xf32>
    %301 = arith.mulf %294, %300 : vector<16x64xf32>
    %302 = arith.mulf %301, %301 : vector<16x64xf32>
    %cst_117 = arith.constant dense<0.000000e+00> : vector<16xf32>
    %303 = vector.multi_reduction <add>, %302, %cst_117 [1] : vector<16x64xf32> to vector<16xf32>
    %304 = vector.shape_cast %303 : vector<16xf32> to vector<16x1xf32>
    %cst_118 = arith.constant 6.400000e+01 : f32
    %305 = vector.broadcast %cst_118 : f32 to vector<16x1xf32>
    %306 = arith.divf %304, %305 : vector<16x1xf32>
    %cst_119 = arith.constant 9.99999974E-6 : f32
    %307 = vector.broadcast %cst_119 : f32 to vector<16x1xf32>
    %308 = arith.addf %306, %307 : vector<16x1xf32>
    %309 = math.rsqrt %308 : vector<16x1xf32>
    %310 = vector.broadcast %309 : vector<16x1xf32> to vector<16x64xf32>
    %311 = arith.mulf %301, %310 : vector<16x64xf32>
    %c0_120 = arith.constant 0 : index
    %c0_121 = arith.constant 0 : index
    %312 = vector.load %arg8[%c0_120, %c0_121] : memref<1x64xf32, #tpu.memory_space<vmem>>, vector<1x64xf32>
    %313 = vector.broadcast %312 : vector<1x64xf32> to vector<16x64xf32>
    %314 = arith.mulf %311, %313 : vector<16x64xf32>
    %c0_122 = arith.constant 0 : index
    %c0_123 = arith.constant 0 : index
    %315 = vector.load %arg9[%c0_122, %c0_123] : memref<64x32xf32, #tpu.memory_space<vmem>>, vector<64x32xf32>
    %cst_124 = arith.constant dense<0.000000e+00> : vector<16x32xf32>
    %316 = tpu.matmul %314, %315, %cst_124 {dimension_numbers = #tpu.dot_dimension_numbers<[1], [0], [0], [1], [0, 0, 1, 1], [], []>} : vector<16x64xf32>, vector<64x32xf32>, vector<16x32xf32> -> vector<16x32xf32>
    %c0_125 = arith.constant 0 : index
    %c0_126 = arith.constant 0 : index
    %c0_127 = arith.constant 0 : index
    %317 = vector.load %arg10[%c0_125, %c0_126, %c0_127] : memref<1x16x32xf32, #tpu.memory_space<vmem>>, vector<1x16x32xf32>
    %318 = vector.shape_cast %317 : vector<1x16x32xf32> to vector<16x32xf32>
    %319 = vector.shape_cast %316 : vector<16x32xf32> to vector<1x16x32xf32>
    tpu.vector_store %arg10[%c0_125, %c0_126, %c0_127], %319 {strides = array<i32>} : memref<1x16x32xf32, #tpu.memory_space<vmem>>, vector<1x16x32xf32>,
    return
  }
  func.func @transform_0(%arg0: i32) -> (i32, i32, i32) {
    %c0_i32 = arith.constant 0 : i32
    %c0_i32_0 = arith.constant 0 : i32
    %c0_i32_1 = arith.constant 0 : i32
    return %arg0, %c0_i32, %c0_i32_0 : i32, i32, i32
  }
  func.func @transform_1(%arg0: i32) -> (i32, i32) {
    %c0_i32 = arith.constant 0 : i32
    %c0_i32_0 = arith.constant 0 : i32
    %c0_i32_1 = arith.constant 0 : i32
    return %c0_i32, %c0_i32_0 : i32, i32
  }
  func.func @transform_2(%arg0: i32) -> (i32, i32) {
    %c0_i32 = arith.constant 0 : i32
    %c0_i32_0 = arith.constant 0 : i32
    %c0_i32_1 = arith.constant 0 : i32
    return %c0_i32, %c0_i32_0 : i32, i32
  }
  func.func @transform_3(%arg0: i32) -> (i32, i32) {
    %c0_i32 = arith.constant 0 : i32
    %c0_i32_0 = arith.constant 0 : i32
    %c0_i32_1 = arith.constant 0 : i32
    return %c0_i32, %c0_i32_0 : i32, i32
  }
  func.func @transform_4(%arg0: i32) -> (i32, i32) {
    %c0_i32 = arith.constant 0 : i32
    %c0_i32_0 = arith.constant 0 : i32
    %c0_i32_1 = arith.constant 0 : i32
    return %c0_i32, %c0_i32_0 : i32, i32
  }
  func.func @transform_5(%arg0: i32) -> (i32, i32) {
    %c0_i32 = arith.constant 0 : i32
    %c0_i32_0 = arith.constant 0 : i32
    %c0_i32_1 = arith.constant 0 : i32
    return %c0_i32, %c0_i32_0 : i32, i32
  }
  func.func @transform_6(%arg0: i32) -> (i32, i32) {
    %c0_i32 = arith.constant 0 : i32
    %c0_i32_0 = arith.constant 0 : i32
    %c0_i32_1 = arith.constant 0 : i32
    return %c0_i32, %c0_i32_0 : i32, i32
  }
  func.func @transform_7(%arg0: i32) -> (i32, i32) {
    %c0_i32 = arith.constant 0 : i32
    %c0_i32_0 = arith.constant 0 : i32
    %c0_i32_1 = arith.constant 0 : i32
    return %c0_i32, %c0_i32_0 : i32, i32
  }
  func.func @transform_8(%arg0: i32) -> (i32, i32) {
    %c0_i32 = arith.constant 0 : i32
    %c0_i32_0 = arith.constant 0 : i32
    %c0_i32_1 = arith.constant 0 : i32
    return %c0_i32, %c0_i32_0 : i32, i32
  }
  func.func @transform_9(%arg0: i32) -> (i32, i32, i32) {
    %c0_i32 = arith.constant 0 : i32
    %c0_i32_0 = arith.constant 0 : i32
    %c0_i32_1 = arith.constant 0 : i32
    return %arg0, %c0_i32, %c0_i32_0 : i32, i32, i32
  }
}

</mosaic_0001>

<llo_original>
// kernel: mamba2_block_forward.1
$region0: #{mamba2_block_forward.1}
  #allocation0 [shape = 'u32[]', space=smem, size = 0x4, offset = 0x4, fixed_abs, tag = 'smem constant byte address 0x4 - core index']
  #allocation1 [shape = 'u32[72,128]{1,0:T(1,128)}', space=vmem, size = 0x9000, scoped, tag = 'internal scratch']
  #allocation2 [shape = 'f32[16,128]{1,0:T(8,128)}', space=vmem, size = 0x2000, scoped, tag = 'scratch operand']
  #allocation3 [shape = 'f32[16,8,128]{2,1,0:T(8,128)}', space=vmem, size = 0x10000, scoped, tag = 'scratch operand']
  %s0 = inlined_call_operand.vmem [shape: f32[2,16,32], index: 0, kind: input, shape index: {}]
  %s1 = inlined_call_operand.vmem [shape: f32[32,224], index: 1, kind: input, shape index: {}]
  %s2 = inlined_call_operand.vmem [shape: f32[4,96], index: 2, kind: input, shape index: {}]
  %s3 = inlined_call_operand.vmem [shape: f32[1,96], index: 3, kind: input, shape index: {}]
  %s4 = inlined_call_operand.vmem [shape: f32[1,64], index: 4, kind: input, shape index: {}]
  %s5 = inlined_call_operand.vmem [shape: f32[1,64], index: 5, kind: input, shape index: {}]
  %s6 = inlined_call_operand.vmem [shape: f32[1,64], index: 6, kind: input, shape index: {}]
  %s7 = inlined_call_operand.vmem [shape: f32[1,64], index: 7, kind: input, shape index: {}]
  %s8 = inlined_call_operand.vmem [shape: f32[64,32], index: 8, kind: input, shape index: {}]
  %s9 = inlined_call_operand.hbm [shape: f32[2,16,32], index: 9, kind: output, shape index: {}]
  %s10 = sld [smem:[#allocation0]]
  $region69: #{mamba2_block_forward.1} parent=0
    _
  %s12 = ssub.s32 1, %s10
  %s13 = scalar_select 0, %s12, %s10
  $region1: #{mamba2_block_forward.1} parent=0
    #allocation4 [shape = 'u8[16384]{0}', space=vmem, size = 0x4000, scoped, tag = 'output window, operand 0']
    #allocation5 [shape = 's32[2]{0}', space=sflag, size = 0x8, scoped, tag = 'scoped memory for mamba2_block_forward.1']
    %14 = vsyncpa [#allocation5], 0
    %s15 = scalar_lea.sflag [#allocation5], 1
    %16 = vsyncpa %s15, 0
    loop: start=0, step=1, limit=4
    $region2: #{mamba2_block_forward.1} parent=1 // loop_pre_header
      _
    $region3: #{mamba2_block_forward.1} parent=1 // loop_header
      %s18 = sphi 0, %s22
      %p19 = scmp.ge.s32.totalorder %s18, 4
      %s28 = sphi 0, %s30
      %s31 = sphi 0, %s28
      %s32 = sphi 0, %s31
      %s48 = sphi 0, %s32
      %s52 = sphi 0, %s52
      %s54 = sphi 0, %s52
      %s55 = sphi 0, %s54
      %s69 = sphi 0, %s55
      %s73 = sphi 0, %s73
      %s75 = sphi 0, %s73
      %s76 = sphi 0, %s75
      %s90 = sphi 0, %s76
      %s94 = sphi 0, %s94
      %s96 = sphi 0, %s94
      %s97 = sphi 0, %s96
      %s111 = sphi 0, %s97
      %s115 = sphi 0, %s115
      %s117 = sphi 0, %s115
      %s118 = sphi 0, %s117
      %s132 = sphi 0, %s118
      %s136 = sphi 0, %s136
      %s138 = sphi 0, %s136
      %s139 = sphi 0, %s138
      %s153 = sphi 0, %s139
      %s157 = sphi 0, %s157
      %s159 = sphi 0, %s157
      %s160 = sphi 0, %s159
      %s174 = sphi 0, %s160
      %s178 = sphi 0, %s178
      %s180 = sphi 0, %s178
      %s181 = sphi 0, %s180
      %s195 = sphi 0, %s181
      %s199 = sphi 0, %s199
      %s201 = sphi 0, %s199
      %s202 = sphi 0, %s201
      %s216 = sphi 0, %s202
      %s222 = sphi 0, %s224
      %s225 = sphi 0, %s222
      %s226 = sphi 0, %s225
      %s242 = sphi 0, %s226
    $region4: #{mamba2_block_forward.1} parent=1 // loop_header_branch
      %21 = sbr.rel (%p19) target = $region8
    $region5: #{mamba2_block_forward.1} parent=1 // loop_body
      %s23 = ssub.s32 %s18, 1
      %s24 = ssub.s32 %s18, 2
      %s25 = sadd.s32 %s18, 1
      %s26 = ssub.s32 %s18, %s25
      %p27 = scmp.eq.s32.totalorder %s26, 0
      %s29 = sadd.s32 %s28, 1
      %s30 = scalar_select %p27, %s28, %s29
      %p33 = pneg %p27
      %p34 = scmp.eq.s32.totalorder %s18, 1
      %p35 = por %p33, %p34
      %p36 = scmp.ne.s32.totalorder %s28, %s31
      %p37 = scmp.eq.s32.totalorder %s18, 0
      %p38 = por %p36, %p37
      %p39 = scmp.ne.s32.totalorder %s28, %s31
      %p40 = scmp.eq.s32.totalorder %s23, 1
      %p41 = por %p39, %p40
      %p42 = scmp.ne.s32.totalorder %s31, %s32
      %p43 = scmp.eq.s32.totalorder %s23, 0
      %p44 = por %p42, %p43
      %p45 = scmp.ne.s32.totalorder %s31, %s32
      %p46 = scmp.eq.s32.totalorder %s24, 1
      %p47 = por %p45, %p46
      %p49 = scmp.ne.s32.totalorder %s32, %s48
      %p50 = scmp.eq.s32.totalorder %s24, 0
      %p51 = por %p49, %p50
      %s53 = sadd.s32 %s52, 1
      %p56 = scmp.eq.s32.totalorder %s18, 1
      %p57 = scmp.ne.s32.totalorder %s52, %s54
      %p58 = scmp.eq.s32.totalorder %s18, 0
      %p59 = por %p57, %p58
      %p60 = scmp.ne.s32.totalorder %s52, %s54
      %p61 = scmp.eq.s32.totalorder %s23, 1
      %p62 = por %p60, %p61
      %p63 = scmp.ne.s32.totalorder %s54, %s55
      %p64 = scmp.eq.s32.totalorder %s23, 0
      %p65 = por %p63, %p64
      %p66 = scmp.ne.s32.totalorder %s54, %s55
      %p67 = scmp.eq.s32.totalorder %s24, 1
      %p68 = por %p66, %p67
      %p70 = scmp.ne.s32.totalorder %s55, %s69
      %p71 = scmp.eq.s32.totalorder %s24, 0
      %p72 = por %p70, %p71
      %s74 = sadd.s32 %s73, 1
      %p77 = scmp.eq.s32.totalorder %s18, 1
      %p78 = scmp.ne.s32.totalorder %s73, %s75
      %p79 = scmp.eq.s32.totalorder %s18, 0
      %p80 = por %p78, %p79
      %p81 = scmp.ne.s32.totalorder %s73, %s75
      %p82 = scmp.eq.s32.totalorder %s23, 1
      %p83 = por %p81, %p82
      %p84 = scmp.ne.s32.totalorder %s75, %s76
      %p85 = scmp.eq.s32.totalorder %s23, 0
      %p86 = por %p84, %p85
      %p87 = scmp.ne.s32.totalorder %s75, %s76
      %p88 = scmp.eq.s32.totalorder %s24, 1
      %p89 = por %p87, %p88
      %p91 = scmp.ne.s32.totalorder %s76, %s90
      %p92 = scmp.eq.s32.totalorder %s24, 0
      %p93 = por %p91, %p92
      %s95 = sadd.s32 %s94, 1
      %p98 = scmp.eq.s32.totalorder %s18, 1
      %p99 = scmp.ne.s32.totalorder %s94, %s96
      %p100 = scmp.eq.s32.totalorder %s18, 0
      %p101 = por %p99, %p100
      %p102 = scmp.ne.s32.totalorder %s94, %s96
      %p103 = scmp.eq.s32.totalorder %s23, 1
      %p104 = por %p102, %p103
      %p105 = scmp.ne.s32.totalorder %s96, %s97
      %p106 = scmp.eq.s32.totalorder %s23, 0
      %p107 = por %p105, %p106
      %p108 = scmp.ne.s32.totalorder %s96, %s97
      %p109 = scmp.eq.s32.totalorder %s24, 1
      %p110 = por %p108, %p109
      %p112 = scmp.ne.s32.totalorder %s97, %s111
      %p113 = scmp.eq.s32.totalorder %s24, 0
      %p114 = por %p112, %p113
      %s116 = sadd.s32 %s115, 1
      %p119 = scmp.eq.s32.totalorder %s18, 1
      %p120 = scmp.ne.s32.totalorder %s115, %s117
      %p121 = scmp.eq.s32.totalorder %s18, 0
      %p122 = por %p120, %p121
      %p123 = scmp.ne.s32.totalorder %s115, %s117
      %p124 = scmp.eq.s32.totalorder %s23, 1
      %p125 = por %p123, %p124
      %p126 = scmp.ne.s32.totalorder %s117, %s118
      %p127 = scmp.eq.s32.totalorder %s23, 0
      %p128 = por %p126, %p127
      %p129 = scmp.ne.s32.totalorder %s117, %s118
      %p130 = scmp.eq.s32.totalorder %s24, 1
      %p131 = por %p129, %p130
      %p133 = scmp.ne.s32.totalorder %s118, %s132
      %p134 = scmp.eq.s32.totalorder %s24, 0
      %p135 = por %p133, %p134
      %s137 = sadd.s32 %s136, 1
      %p140 = scmp.eq.s32.totalorder %s18, 1
      %p141 = scmp.ne.s32.totalorder %s136, %s138
      %p142 = scmp.eq.s32.totalorder %s18, 0
      %p143 = por %p141, %p142
      %p144 = scmp.ne.s32.totalorder %s136, %s138
      %p145 = scmp.eq.s32.totalorder %s23, 1
      %p146 = por %p144, %p145
      %p147 = scmp.ne.s32.totalorder %s138, %s139
      %p148 = scmp.eq.s32.totalorder %s23, 0
      %p149 = por %p147, %p148
      %p150 = scmp.ne.s32.totalorder %s138, %s139
      %p151 = scmp.eq.s32.totalorder %s24, 1
      %p152 = por %p150, %p151
      %p154 = scmp.ne.s32.totalorder %s139, %s153
      %p155 = scmp.eq.s32.totalorder %s24, 0
      %p156 = por %p154, %p155
      %s158 = sadd.s32 %s157, 1
      %p161 = scmp.eq.s32.totalorder %s18, 1
      %p162 = scmp.ne.s32.totalorder %s157, %s159
      %p163 = scmp.eq.s32.totalorder %s18, 0
      %p164 = por %p162, %p163
      %p165 = scmp.ne.s32.totalorder %s157, %s159
      %p166 = scmp.eq.s32.totalorder %s23, 1
      %p167 = por %p165, %p166
      %p168 = scmp.ne.s32.totalorder %s159, %s160
      %p169 = scmp.eq.s32.totalorder %s23, 0
      %p170 = por %p168, %p169
      %p171 = scmp.ne.s32.totalorder %s159, %s160
      %p172 = scmp.eq.s32.totalorder %s24, 1
      %p173 = por %p171, %p172
      %p175 = scmp.ne.s32.totalorder %s160, %s174
      %p176 = scmp.eq.s32.totalorder %s24, 0
      %p177 = por %p175, %p176
      %s179 = sadd.s32 %s178, 1
      %p182 = scmp.eq.s32.totalorder %s18, 1
      %p183 = scmp.ne.s32.totalorder %s178, %s180
      %p184 = scmp.eq.s32.totalorder %s18, 0
      %p185 = por %p183, %p184
      %p186 = scmp.ne.s32.totalorder %s178, %s180
      %p187 = scmp.eq.s32.totalorder %s23, 1
      %p188 = por %p186, %p187
      %p189 = scmp.ne.s32.totalorder %s180, %s181
      %p190 = scmp.eq.s32.totalorder %s23, 0
      %p191 = por %p189, %p190
      %p192 = scmp.ne.s32.totalorder %s180, %s181
      %p193 = scmp.eq.s32.totalorder %s24, 1
      %p194 = por %p192, %p193
      %p196 = scmp.ne.s32.totalorder %s181, %s195
      %p197 = scmp.eq.s32.totalorder %s24, 0
      %p198 = por %p196, %p197
      %s200 = sadd.s32 %s199, 1
      %p203 = scmp.eq.s32.totalorder %s18, 1
      %p204 = scmp.ne.s32.totalorder %s199, %s201
      %p205 = scmp.eq.s32.totalorder %s18, 0
      %p206 = por %p204, %p205
      %p207 = scmp.ne.s32.totalorder %s199, %s201
      %p208 = scmp.eq.s32.totalorder %s23, 1
      %p209 = por %p207, %p208
      %p210 = scmp.ne.s32.totalorder %s201, %s202
      %p211 = scmp.eq.s32.totalorder %s23, 0
      %p212 = por %p210, %p211
      %p213 = scmp.ne.s32.totalorder %s201, %s202
      %p214 = scmp.eq.s32.totalorder %s24, 1
      %p215 = por %p213, %p214
      %p217 = scmp.ne.s32.totalorder %s202, %s216
      %p218 = scmp.eq.s32.totalorder %s24, 0
      %p219 = por %p217, %p218
      %s220 = ssub.s32 %s18, %s25
      %p221 = scmp.eq.s32.totalorder %s220, 0
      %s223 = sadd.s32 %s222, 1
      %s224 = scalar_select %p221, %s222, %s223
      %p227 = pneg %p221
      %p228 = scmp.eq.s32.totalorder %s18, 1
      %p229 = por %p227, %p228
      %p230 = scmp.ne.s32.totalorder %s222, %s225
      %p231 = scmp.eq.s32.totalorder %s18, 0
      %p232 = por %p230, %p231
      %p233 = scmp.ne.s32.totalorder %s222, %s225
      %p234 = scmp.eq.s32.totalorder %s23, 1
      %p235 = por %p233, %p234
      %p236 = scmp.ne.s32.totalorder %s225, %s226
      %p237 = scmp.eq.s32.totalorder %s23, 0
      %p238 = por %p236, %p237
      %p239 = scmp.ne.s32.totalorder %s225, %s226
      %p240 = scmp.eq.s32.totalorder %s24, 1
      %p241 = por %p239, %p240
      %p243 = scmp.ne.s32.totalorder %s226, %s242
      %p244 = scmp.eq.s32.totalorder %s24, 0
      %p245 = por %p243, %p244
      %p246 = scmp.le.s32.totalorder 1, %s18
      %p247 = scmp.lt.s32.totalorder %s18, 3
      %p248 = pnand %p246, %p247
      %p249 = pneg %p248
      // Predicated region
      $region9: #{mamba2_block_forward.1} parent=5 // pred_check
        _
      $region10: #{mamba2_block_forward.1} parent=5 // pred_check_branch
        %251 = sbr.rel (%p248) target = $region12
      $region11: #{mamba2_block_forward.1} parent=5 // pred_region
        %s252 = ssub.s32 %s18, 1
        // Predicated region
        $region13: #{mamba2_block_forward.1} parent=11 // pred_check
          %p253 = pneg %p65
        $region14: #{mamba2_block_forward.1} parent=11 // pred_check_branch
          %255 = sbr.rel (%p253) target = $region16
        $region15: #{mamba2_block_forward.1} parent=11 // pred_region
          _
        $region16: #{mamba2_block_forward.1} parent=11 // pred_fallthru
          _
        // Predicated region
        $region17: #{mamba2_block_forward.1} parent=11 // pred_check
          %p256 = pneg %p86
        $region18: #{mamba2_block_forward.1} parent=11 // pred_check_branch
          %258 = sbr.rel (%p256) target = $region20
        $region19: #{mamba2_block_forward.1} parent=11 // pred_region
          _
        $region20: #{mamba2_block_forward.1} parent=11 // pred_fallthru
          _
        // Predicated region
        $region21: #{mamba2_block_forward.1} parent=11 // pred_check
          %p259 = pneg %p107
        $region22: #{mamba2_block_forward.1} parent=11 // pred_check_branch
          %261 = sbr.rel (%p259) target = $region24
        $region23: #{mamba2_block_forward.1} parent=11 // pred_region
          _
        $region24: #{mamba2_block_forward.1} parent=11 // pred_fallthru
          _
        // Predicated region
        $region25: #{mamba2_block_forward.1} parent=11 // pred_check
          %p262 = pneg %p128
        $region26: #{mamba2_block_forward.1} parent=11 // pred_check_branch
          %264 = sbr.rel (%p262) target = $region28
        $region27: #{mamba2_block_forward.1} parent=11 // pred_region
          _
        $region28: #{mamba2_block_forward.1} parent=11 // pred_fallthru
          _
        // Predicated region
        $region29: #{mamba2_block_forward.1} parent=11 // pred_check
          %p265 = pneg %p149
        $region30: #{mamba2_block_forward.1} parent=11 // pred_check_branch
          %267 = sbr.rel (%p265) target = $region32
        $region31: #{mamba2_block_forward.1} parent=11 // pred_region
          _
        $region32: #{mamba2_block_forward.1} parent=11 // pred_fallthru
          _
        // Predicated region
        $region33: #{mamba2_block_forward.1} parent=11 // pred_check
          %p268 = pneg %p170
        $region34: #{mamba2_block_forward.1} parent=11 // pred_check_branch
          %270 = sbr.rel (%p268) target = $region36
        $region35: #{mamba2_block_forward.1} parent=11 // pred_region
          _
        $region36: #{mamba2_block_forward.1} parent=11 // pred_fallthru
          _
        // Predicated region
        $region37: #{mamba2_block_forward.1} parent=11 // pred_check
          %p271 = pneg %p191
        $region38: #{mamba2_block_forward.1} parent=11 // pred_check_branch
          %273 = sbr.rel (%p271) target = $region40
        $region39: #{mamba2_block_forward.1} parent=11 // pred_region
          _
        $region40: #{mamba2_block_forward.1} parent=11 // pred_fallthru
          _
        // Predicated region
        $region41: #{mamba2_block_forward.1} parent=11 // pred_check
          %p274 = pneg %p212
        $region42: #{mamba2_block_forward.1} parent=11 // pred_check_branch
          %276 = sbr.rel (%p274) target = $region44
        $region43: #{mamba2_block_forward.1} parent=11 // pred_region
          _
        $region44: #{mamba2_block_forward.1} parent=11 // pred_fallthru
          _
      $region12: #{mamba2_block_forward.1} parent=5 // pred_fallthru
        _
      %p277 = scmp.lt.s32.totalorder %s18, 2
      // Predicated region
      $region45: #{mamba2_block_forward.1} parent=5 // pred_check
        %p278 = pneg %p277
      $region46: #{mamba2_block_forward.1} parent=5 // pred_check_branch
        %280 = sbr.rel (%p278) target = $region48
      $region47: #{mamba2_block_forward.1} parent=5 // pred_region
        // Predicated region
        $region49: #{mamba2_block_forward.1} parent=47 // pred_check
          %p281 = pneg %p38
        $region50: #{mamba2_block_forward.1} parent=47 // pred_check_branch
          %283 = sbr.rel (%p281) target = $region52
        $region51: #{mamba2_block_forward.1} parent=47 // pred_region
          %p284 = scmp.lt.s32.totalorder %s18, 1
          %s285 = scalar_select %p284, %s18, 1
          %s286 = smul.addr %s285, 2
          %s287 = smul.addr %s286, 8
          %s288 = scalar_lea.vmem %s0, %s287
        $region52: #{mamba2_block_forward.1} parent=47 // pred_fallthru
          _
      $region48: #{mamba2_block_forward.1} parent=5 // pred_fallthru
        _
      %p289 = scmp.le.s32.totalorder 1, %s18
      %p290 = scmp.lt.s32.totalorder %s18, 3
      %p291 = pnand %p289, %p290
      %p292 = pneg %p291
      // Predicated region
      $region53: #{mamba2_block_forward.1} parent=5 // pred_check
        _
      $region54: #{mamba2_block_forward.1} parent=5 // pred_check_branch
        %294 = sbr.rel (%p291) target = $region56
      $region55: #{mamba2_block_forward.1} parent=5 // pred_region
        %s295 = ssub.s32 %s18, 1
        %p296 = scmp.lt.s32.totalorder %s23, 1
        %s297 = scalar_select %p296, %s23, 1
        %s298 = smul.addr %s297, 2
        %s299 = smul.addr %s298, 8
        %s300 = scalar_lea.vmem %s0, %s299
        %p301 = pneg %p44
        %p302 = pneg %p41
        %p303 = pneg %p65
        %p304 = pneg %p62
        %p305 = pneg %p86
        %p306 = pneg %p83
        %p307 = pneg %p107
        %p308 = pneg %p104
        %p309 = pneg %p128
        %p310 = pneg %p125
        %p311 = pneg %p149
        %p312 = pneg %p146
        %p313 = pneg %p170
        %p314 = pneg %p167
        %p315 = pneg %p191
        %p316 = pneg %p188
        %p317 = pneg %p212
        %p318 = pneg %p209
        %p319 = pneg %p238
        %p320 = pneg %p235
        %s321 = sand.u32 %s225, 1
        %s322 = scalar_lea.sflag [#allocation5], %s321
        %s323 = sand.u32 %s225, 1
        %s324 = smul.addr %s323, 16
        %s325 = scalar_lea.vmem [#allocation4], %s324
        %p326 = scmp.lt.s32.totalorder %s23, 1
        %s327 = scalar_select %p326, %s23, 1
        %s328 = smul.addr %s327, 2
        %s329 = smul.addr %s328, 8
        %s330 = scalar_lea.vmem %s0, %s329
        %v331 = vld [vmem:[%s330] sm:$0xff]
        %v332 = vld [vmem:[%s330 + $0x8] sm:$0xff]
        %v333 = vld [vmem:[%s1] sm:$0xff]
        %v334 = vld [vmem:[%s1 + $0x8] sm:$0xff]
        %v335 = vld [vmem:[%s1 + $0x10] sm:$0xff]
        %v336 = vld [vmem:[%s1 + $0x18] sm:$0xff]
        %v337 = vld [vmem:[%s1 + $0x20] sm:$0xff]
        %v338 = vld [vmem:[%s1 + $0x28] sm:$0xff]
        %v339 = vld [vmem:[%s1 + $0x30] sm:$0xff]
        %v340 = vld [vmem:[%s1 + $0x38] sm:$0xff]
        %vm341 = vcmask 261120
        %v343 = vsel %vm341, %v331, 0
        %v346 = vsel %vm341, %v332, 0
        %348 = vmatpush.msra.mxu0 0.0
        %349 = vmatpush.msra.mxu0 0.0
        %350 = vmatpush.msra.mxu0 0.0
        %351 = vmatpush.msra.mxu0 0.0
        %352 = vmatpush.msra.mxu0 0.0
        %353 = vmatpush.msra.mxu0 0.0
        %354 = vmatpush.msra.mxu0 0.0
        %355 = vmatpush.msra.mxu0 0.0
        %356 = vmatpush.msra.mxu0 0.0
        %357 = vmatpush.msra.mxu0 0.0
        %358 = vmatpush.msra.mxu0 0.0
        %359 = vmatpush.msra.mxu0 0.0
        %360 = vmatpush.msra.mxu0 %v339
        %361 = vmatpush.msra.mxu0 %v337
        %362 = vmatpush.msra.mxu0 %v335
        %363 = vmatpush.msra.mxu0 %v333
        %364 = vmatmul.f32.gmra.mxu0 %v343
        %v365 = vpop.f32.mrf.mxu0
        %v366 = vadd.f32 0.0, %v365
        %367 = vmatmul.f32.gmra.mxu0 %v346
        %v368 = vpop.f32.mrf.mxu0
        %v369 = vadd.f32 0.0, %v368
        %370 = vdwg.mxu0
        %371 = vmatpush.msra.mxu0 0.0
        %372 = vmatpush.msra.mxu0 0.0
        %373 = vmatpush.msra.mxu0 0.0
        %374 = vmatpush.msra.mxu0 0.0
        %375 = vmatpush.msra.mxu0 0.0
        %376 = vmatpush.msra.mxu0 0.0
        %377 = vmatpush.msra.mxu0 0.0
        %378 = vmatpush.msra.mxu0 0.0
        %379 = vmatpush.msra.mxu0 0.0
        %380 = vmatpush.msra.mxu0 0.0
        %381 = vmatpush.msra.mxu0 0.0
        %382 = vmatpush.msra.mxu0 0.0
        %383 = vmatpush.msra.mxu0 %v340
        %384 = vmatpush.msra.mxu0 %v338
        %385 = vmatpush.msra.mxu0 %v336
        %386 = vmatpush.msra.mxu0 %v334
        %387 = vmatmul.f32.gmra.mxu0 %v343
        %v388 = vpop.f32.mrf.mxu0
        %v389 = vadd.f32 0.0, %v388
        %390 = vmatmul.f32.gmra.mxu0 %v346
        %v391 = vpop.f32.mrf.mxu0
        %v392 = vadd.f32 0.0, %v391
        %393 = vdwg.mxu0
        %v394 = vld [vmem:[%s2] sm:$0xf]
        %v395 = vlaneseq
        %v396 = vshrl.u32 %v395, 7
        %v397 = vadd.s32 %v396, 8
        %v398 = vperm.slane %v394, 3
        %v399 = vmul.f32 %v366, %v398
        %v400 = vmul.f32 %v369, %v398
        %v401 = vld [vmem:[%s3] sm:$0x1]
        %v403 = vperm.slane %v401, 0
        %v405 = vadd.f32 %v399, %v403
        %v406 = vadd.f32 %v400, %v403
        %vm407 = vcmp.ge.s32.totalorder %v396, 3
        %vm408 = vcmp.ge.s32.totalorder %v397, 3
        %v409 = vrot.slane %v366, 5
        %v410 = vrot.slane %v369, 5
        %vm411 = vcmp.lt.s32.totalorder %v396, 3
        %v412 = vsel %vm411, %v409, %v410
        %v413 = vsel %vm411, %v410, %v409
        %v414 = vsel %vm407, %v413, 0.0
        %v415 = vsel %vm408, %v412, 0.0
        %v416 = vperm.slane %v394, 0
        %v417 = vmul.f32 %v414, %v416
        %v418 = vmul.f32 %v415, %v416
        %v419 = vadd.f32 %v405, %v417
        %v420 = vadd.f32 %v406, %v418
        %vm421 = vcmp.ge.s32.totalorder %v396, 2
        %vm422 = vcmp.ge.s32.totalorder %v397, 2
        %v423 = vrot.slane %v366, 6
        %v424 = vrot.slane %v369, 6
        %vm425 = vcmp.lt.s32.totalorder %v396, 2
        %v426 = vsel %vm425, %v423, %v424
        %v427 = vsel %vm425, %v424, %v423
        %v428 = vsel %vm421, %v427, 0.0
        %v429 = vsel %vm422, %v426, 0.0
        %v430 = vperm.slane %v394, 1
        %v431 = vmul.f32 %v428, %v430
        %v432 = vmul.f32 %v429, %v430
        %v433 = vadd.f32 %v419, %v431
        %v434 = vadd.f32 %v420, %v432
        %vm435 = vcmp.ge.s32.totalorder %v396, 1
        %vm436 = vcmp.ge.s32.totalorder %v397, 1
        %v437 = vrot.slane %v366, 7
        %v438 = vrot.slane %v369, 7
        %vm439 = vcmp.lt.s32.totalorder %v396, 1
        %v440 = vsel %vm439, %v437, %v438
        %v441 = vsel %vm439, %v438, %v437
        %v442 = vsel %vm435, %v441, 0.0
        %v443 = vsel %vm436, %v440, 0.0
        %v444 = vperm.slane %v394, 2
        %v445 = vmul.f32 %v442, %v444
        %v446 = vmul.f32 %v443, %v444
        %v447 = vadd.f32 %v433, %v445
        %v448 = vadd.f32 %v434, %v446
        %v449 = vxor.u32 %v447, 2147483648
        %v450 = vxor.u32 %v448, 2147483648
        %v451 = vmul.f32 %v449, 1.442695
        %v452 = vpow.pop %v451
        %v453 = vmul.f32 %v450, 1.442695
        %v454 = vpow.pop %v453
        %v455 = vadd.f32 %v452, 1.0
        %v456 = vadd.f32 %v454, 1.0
        %v457 = vrcp.pop %v455
        %v458 = vmul.f32 %v455, %v457
        %v459 = vsub.f32 1.0, %v458
        %v460 = vmul.f32 %v457, %v459
        %v461 = vadd.f32 %v457, %v460
        %vm462 = vweird.f32 %v455
        %vm463 = vweird.f32 %v457
        %vm464 = vmor %vm462, %vm463
        %v465 = vsel %vm464, %v457, %v461
        %v466 = vand.u32 2147483647, %v455
        %vm467 = vcmp.eq.f32.partialorder %v466, 8.507059e+37
        %v468 = vand.u32 %v455, 2147483648
        %v469 = vor.u32 1.1754944e-38, %v468
        %v470 = vsel %vm467, %v469, %v465
        %v471 = vmul.f32 1.0, %v470
        %v472 = vrcp.pop %v456
        %v473 = vmul.f32 %v456, %v472
        %v474 = vsub.f32 1.0, %v473
        %v475 = vmul.f32 %v472, %v474
        %v476 = vadd.f32 %v472, %v475
        %vm477 = vweird.f32 %v456
        %vm478 = vweird.f32 %v472
        %vm479 = vmor %vm477, %vm478
        %v480 = vsel %vm479, %v472, %v476
        %v481 = vand.u32 2147483647, %v456
        %vm482 = vcmp.eq.f32.partialorder %v481, 8.507059e+37
        %v483 = vand.u32 %v456, 2147483648
        %v484 = vor.u32 1.1754944e-38, %v483
        %v485 = vsel %vm482, %v484, %v480
        %v486 = vmul.f32 1.0, %v485
        %v487 = vmul.f32 %v447, %v471
        %v488 = vmul.f32 %v448, %v486
        %v489 = vld [vmem:[%s5] sm:$0x1]
        %v491 = vperm.slane %v489, 0
        %492 = vrot.lane.b32.xlu0 %v491, 32
        %v493 = vpop.permute.xlu0 %492
        %v495 = vadd.f32 %v389, %v493
        %v496 = vadd.f32 %v392, %v493
        %v497 = vmax.f32 %v495, 0.0
        %v498 = vmax.f32 %v496, 0.0
        %v499 = vand.u32 2147483647, %v495
        %v500 = vand.u32 2147483647, %v496
        %v501 = vsub.f32 0.0, %v499
        %v502 = vsub.f32 0.0, %v500
        %v503 = vmul.f32 %v501, 1.442695
        %v504 = vpow.pop %v503
        %v505 = vmul.f32 %v502, 1.442695
        %v506 = vpow.pop %v505
        %v507 = vadd.f32 %v504, 1.0
        %v508 = vlog2.pop %v507
        %v509 = vmul.f32 %v508, 0.6931472
        %v510 = vmul.f32 -0.5, %v504
        %v511 = vadd.f32 %v510, 1.0
        %v512 = vmul.f32 %v511, %v504
        %v513 = vand.u32 2147483647, %v504
        %vm514 = vcmp.lt.f32.partialorder %v513, 0.0004427343
        %v515 = vsel %vm514, %v512, %v509
        %v516 = vadd.f32 %v506, 1.0
        %v517 = vlog2.pop %v516
        %v518 = vmul.f32 %v517, 0.6931472
        %v519 = vmul.f32 -0.5, %v506
        %v520 = vadd.f32 %v519, 1.0
        %v521 = vmul.f32 %v520, %v506
        %v522 = vand.u32 2147483647, %v506
        %vm523 = vcmp.lt.f32.partialorder %v522, 0.0004427343
        %v524 = vsel %vm523, %v521, %v518
        %v525 = vadd.f32 %v497, %v515
        %v526 = vadd.f32 %v498, %v524
        %v527 = vld [vmem:[%s4] sm:$0x1]
        %v529 = vperm.slane %v527, 0
        %530 = vrot.lane.b32.xlu0 %v529, 32
        %v531 = vpop.permute.xlu0 %530
        %v533 = vmul.f32 %v525, %v531
        %v534 = vmul.f32 %v526, %v531
        %v535 = vmul.f32 %v533, 1.442695
        %v536 = vpow.pop %v535
        %v537 = vmul.f32 %v534, 1.442695
        %v538 = vpow.pop %v537
        %541 = vrot.lane.b32.xlu0 %v487, 32
        %v542 = vpop.permute.xlu0 %541
        %543 = vrot.lane.b32.xlu0 %v488, 32
        %v544 = vpop.permute.xlu0 %543
        %v547 = vmul.f32 %v525, %v542
        %v548 = vmul.f32 %v526, %v544
        %551 = vrot.lane.b32.xlu0 %v536, 96
        %v552 = vpop.permute.xlu0 %551
        %553 = vrot.lane.b32.xlu0 %v538, 96
        %v554 = vpop.permute.xlu0 %553
        %557 = vrot.lane.b32.xlu0 %v536, 32
        %v558 = vpop.permute.xlu0 %557
        %559 = vrot.lane.b32.xlu0 %v538, 32
        %v560 = vpop.permute.xlu0 %559
        %vm563 = vcmask 523264
        %v564 = vsel %vm563, %v552, %v558
        %v565 = vsel %vm563, %v554, %v560
        %566 = vst [vmem:[#allocation2] sm:$0xff] %v564
        %567 = vst [vmem:[#allocation2 + $0x8] sm:$0xff] %v565
        %570 = vrot.lane.b32.xlu0 %v547, 96
        %v571 = vpop.permute.xlu0 %570
        %572 = vrot.lane.b32.xlu0 %v548, 96
        %v573 = vpop.permute.xlu0 %572
        %576 = vrot.lane.b32.xlu0 %v547, 32
        %v577 = vpop.permute.xlu0 %576
        %578 = vrot.lane.b32.xlu0 %v548, 32
        %v579 = vpop.permute.xlu0 %578
        %v582 = vsel %vm563, %v571, %v577
        %v583 = vsel %vm563, %v573, %v579
        %v584 = vperm.slane %v487, 0
        %v585 = vlaneseq
        %v586 = vshrl.u32 %v585, 7
        %v587 = vadd.s32 %v586, 64
        %588 = vset.pattern.permute.xlu0 %v587
        %589 = vperm.xlu0 %588, %v584
        %v590 = vpop.permute.xlu0 %589
        %v591 = vperm.slane %v487, 1
        %v592 = vlaneseq
        %v593 = vshrl.u32 %v592, 7
        %v594 = vadd.s32 %v593, 64
        %595 = vset.pattern.permute.xlu0 %v594
        %596 = vperm.xlu0 %595, %v591
        %v597 = vpop.permute.xlu0 %596
        %v598 = vperm.slane %v487, 2
        %v599 = vlaneseq
        %v600 = vshrl.u32 %v599, 7
        %v601 = vadd.s32 %v600, 64
        %602 = vset.pattern.permute.xlu0 %v601
        %603 = vperm.xlu0 %602, %v598
        %v604 = vpop.permute.xlu0 %603
        %v605 = vperm.slane %v487, 3
        %v606 = vlaneseq
        %v607 = vshrl.u32 %v606, 7
        %v608 = vadd.s32 %v607, 64
        %609 = vset.pattern.permute.xlu0 %v608
        %610 = vperm.xlu0 %609, %v605
        %v611 = vpop.permute.xlu0 %610
        %v612 = vperm.slane %v487, 4
        %v613 = vlaneseq
        %v614 = vshrl.u32 %v613, 7
        %v615 = vadd.s32 %v614, 64
        %616 = vset.pattern.permute.xlu0 %v615
        %617 = vperm.xlu0 %616, %v612
        %v618 = vpop.permute.xlu0 %617
        %v619 = vperm.slane %v487, 5
        %v620 = vlaneseq
        %v621 = vshrl.u32 %v620, 7
        %v622 = vadd.s32 %v621, 64
        %623 = vset.pattern.permute.xlu0 %v622
        %624 = vperm.xlu0 %623, %v619
        %v625 = vpop.permute.xlu0 %624
        %v626 = vperm.slane %v487, 6
        %v627 = vlaneseq
        %v628 = vshrl.u32 %v627, 7
        %v629 = vadd.s32 %v628, 64
        %630 = vset.pattern.permute.xlu0 %v629
        %631 = vperm.xlu0 %630, %v626
        %v632 = vpop.permute.xlu0 %631
        %v633 = vperm.slane %v487, 7
        %v634 = vlaneseq
        %v635 = vshrl.u32 %v634, 7
        %v636 = vadd.s32 %v635, 64
        %637 = vset.pattern.permute.xlu0 %v636
        %638 = vperm.xlu0 %637, %v633
        %v639 = vpop.permute.xlu0 %638
        %v640 = vperm.slane %v488, 0
        %v641 = vlaneseq
        %v642 = vshrl.u32 %v641, 7
        %v643 = vadd.s32 %v642, 64
        %644 = vset.pattern.permute.xlu0 %v643
        %645 = vperm.xlu0 %644, %v640
        %v646 = vpop.permute.xlu0 %645
        %v647 = vperm.slane %v488, 1
        %v648 = vlaneseq
        %v649 = vshrl.u32 %v648, 7
        %v650 = vadd.s32 %v649, 64
        %651 = vset.pattern.permute.xlu0 %v650
        %652 = vperm.xlu0 %651, %v647
        %v653 = vpop.permute.xlu0 %652
        %v654 = vperm.slane %v488, 2
        %v655 = vlaneseq
        %v656 = vshrl.u32 %v655, 7
        %v657 = vadd.s32 %v656, 64
        %658 = vset.pattern.permute.xlu0 %v657
        %659 = vperm.xlu0 %658, %v654
        %v660 = vpop.permute.xlu0 %659
        %v661 = vperm.slane %v488, 3
        %v662 = vlaneseq
        %v663 = vshrl.u32 %v662, 7
        %v664 = vadd.s32 %v663, 64
        %665 = vset.pattern.permute.xlu0 %v664
        %666 = vperm.xlu0 %665, %v661
        %v667 = vpop.permute.xlu0 %666
        %v668 = vperm.slane %v488, 4
        %v669 = vlaneseq
        %v670 = vshrl.u32 %v669, 7
        %v671 = vadd.s32 %v670, 64
        %672 = vset.pattern.permute.xlu0 %v671
        %673 = vperm.xlu0 %672, %v668
        %v674 = vpop.permute.xlu0 %673
        %v675 = vperm.slane %v488, 5
        %v676 = vlaneseq
        %v677 = vshrl.u32 %v676, 7
        %v678 = vadd.s32 %v677, 64
        %679 = vset.pattern.permute.xlu0 %v678
        %680 = vperm.xlu0 %679, %v675
        %v681 = vpop.permute.xlu0 %680
        %v682 = vperm.slane %v488, 6
        %v683 = vlaneseq
        %v684 = vshrl.u32 %v683, 7
        %v685 = vadd.s32 %v684, 64
        %686 = vset.pattern.permute.xlu0 %v685
        %687 = vperm.xlu0 %686, %v682
        %v688 = vpop.permute.xlu0 %687
        %v689 = vperm.slane %v488, 7
        %v690 = vlaneseq
        %v691 = vshrl.u32 %v690, 7
        %v692 = vadd.s32 %v691, 64
        %693 = vset.pattern.permute.xlu0 %v692
        %694 = vperm.xlu0 %693, %v689
        %v695 = vpop.permute.xlu0 %694
        %v696 = vlaneseq
        %v697 = vshrl.u32 %v696, 7
        %v698 = vadd.s32 %v697, 72
        %699 = vset.pattern.permute.xlu0 %v698
        %700 = vperm.xlu0 %699, %v584
        %v701 = vpop.permute.xlu0 %700
        %v702 = vlaneseq
        %v703 = vshrl.u32 %v702, 7
        %v704 = vadd.s32 %v703, 72
        %705 = vset.pattern.permute.xlu0 %v704
        %706 = vperm.xlu0 %705, %v591
        %v707 = vpop.permute.xlu0 %706
        %v708 = vlaneseq
        %v709 = vshrl.u32 %v708, 7
        %v710 = vadd.s32 %v709, 72
        %711 = vset.pattern.permute.xlu0 %v710
        %712 = vperm.xlu0 %711, %v598
        %v713 = vpop.permute.xlu0 %712
        %v714 = vlaneseq
        %v715 = vshrl.u32 %v714, 7
        %v716 = vadd.s32 %v715, 72
        %717 = vset.pattern.permute.xlu0 %v716
        %718 = vperm.xlu0 %717, %v605
        %v719 = vpop.permute.xlu0 %718
        %v720 = vlaneseq
        %v721 = vshrl.u32 %v720, 7
        %v722 = vadd.s32 %v721, 72
        %723 = vset.pattern.permute.xlu0 %v722
        %724 = vperm.xlu0 %723, %v612
        %v725 = vpop.permute.xlu0 %724
        %v726 = vlaneseq
        %v727 = vshrl.u32 %v726, 7
        %v728 = vadd.s32 %v727, 72
        %729 = vset.pattern.permute.xlu0 %v728
        %730 = vperm.xlu0 %729, %v619
        %v731 = vpop.permute.xlu0 %730
        %v732 = vlaneseq
        %v733 = vshrl.u32 %v732, 7
        %v734 = vadd.s32 %v733, 72
        %735 = vset.pattern.permute.xlu0 %v734
        %736 = vperm.xlu0 %735, %v626
        %v737 = vpop.permute.xlu0 %736
        %v738 = vlaneseq
        %v739 = vshrl.u32 %v738, 7
        %v740 = vadd.s32 %v739, 72
        %741 = vset.pattern.permute.xlu0 %v740
        %742 = vperm.xlu0 %741, %v633
        %v743 = vpop.permute.xlu0 %742
        %v744 = vlaneseq
        %v745 = vshrl.u32 %v744, 7
        %v746 = vadd.s32 %v745, 72
        %747 = vset.pattern.permute.xlu0 %v746
        %748 = vperm.xlu0 %747, %v640
        %v749 = vpop.permute.xlu0 %748
        %v750 = vlaneseq
        %v751 = vshrl.u32 %v750, 7
        %v752 = vadd.s32 %v751, 72
        %753 = vset.pattern.permute.xlu0 %v752
        %754 = vperm.xlu0 %753, %v647
        %v755 = vpop.permute.xlu0 %754
        %v756 = vlaneseq
        %v757 = vshrl.u32 %v756, 7
        %v758 = vadd.s32 %v757, 72
        %759 = vset.pattern.permute.xlu0 %v758
        %760 = vperm.xlu0 %759, %v654
        %v761 = vpop.permute.xlu0 %760
        %v762 = vlaneseq
        %v763 = vshrl.u32 %v762, 7
        %v764 = vadd.s32 %v763, 72
        %765 = vset.pattern.permute.xlu0 %v764
        %766 = vperm.xlu0 %765, %v661
        %v767 = vpop.permute.xlu0 %766
        %v768 = vlaneseq
        %v769 = vshrl.u32 %v768, 7
        %v770 = vadd.s32 %v769, 72
        %771 = vset.pattern.permute.xlu0 %v770
        %772 = vperm.xlu0 %771, %v668
        %v773 = vpop.permute.xlu0 %772
        %v774 = vlaneseq
        %v775 = vshrl.u32 %v774, 7
        %v776 = vadd.s32 %v775, 72
        %777 = vset.pattern.permute.xlu0 %v776
        %778 = vperm.xlu0 %777, %v675
        %v779 = vpop.permute.xlu0 %778
        %v780 = vlaneseq
        %v781 = vshrl.u32 %v780, 7
        %v782 = vadd.s32 %v781, 72
        %783 = vset.pattern.permute.xlu0 %v782
        %784 = vperm.xlu0 %783, %v682
        %v785 = vpop.permute.xlu0 %784
        %v786 = vlaneseq
        %v787 = vshrl.u32 %v786, 7
        %v788 = vadd.s32 %v787, 72
        %789 = vset.pattern.permute.xlu0 %v788
        %790 = vperm.xlu0 %789, %v689
        %v791 = vpop.permute.xlu0 %790
        %v792 = vsel %vm563, %v590, %v701
        %v793 = vsel %vm563, %v597, %v707
        %v794 = vsel %vm563, %v604, %v713
        %v795 = vsel %vm563, %v611, %v719
        %v796 = vsel %vm563, %v618, %v725
        %v797 = vsel %vm563, %v625, %v731
        %v798 = vsel %vm563, %v632, %v737
        %v799 = vsel %vm563, %v639, %v743
        %v800 = vsel %vm563, %v646, %v749
        %v801 = vsel %vm563, %v653, %v755
        %v802 = vsel %vm563, %v660, %v761
        %v803 = vsel %vm563, %v667, %v767
        %v804 = vsel %vm563, %v674, %v773
        %v805 = vsel %vm563, %v681, %v779
        %v806 = vsel %vm563, %v688, %v785
        %v807 = vsel %vm563, %v695, %v791
        %v810 = vrot.slane %v582, 1
        %v811 = vrot.slane %v582, 2
        %v812 = vrot.slane %v582, 3
        %v813 = vrot.slane %v582, 4
        %v814 = vrot.slane %v582, 5
        %v815 = vrot.slane %v582, 6
        %v816 = vrot.slane %v582, 7
        %v817 = vrot.slane %v583, 1
        %v818 = vrot.slane %v583, 2
        %v819 = vrot.slane %v583, 3
        %v820 = vrot.slane %v583, 4
        %v821 = vrot.slane %v583, 5
        %v822 = vrot.slane %v583, 6
        %v823 = vrot.slane %v583, 7
        %v824 = vperm.slane %v582, 0
        %v825 = vperm.slane %v810, 0
        %v826 = vperm.slane %v811, 0
        %v827 = vperm.slane %v812, 0
        %v828 = vperm.slane %v813, 0
        %v829 = vperm.slane %v814, 0
        %v830 = vperm.slane %v815, 0
        %v831 = vperm.slane %v816, 0
        %v832 = vperm.slane %v583, 0
        %v833 = vperm.slane %v817, 0
        %v834 = vperm.slane %v818, 0
        %v835 = vperm.slane %v819, 0
        %v836 = vperm.slane %v820, 0
        %v837 = vperm.slane %v821, 0
        %v838 = vperm.slane %v822, 0
        %v839 = vperm.slane %v823, 0
        %v856 = vmul.f32 %v792, %v824
        %v857 = vmul.f32 %v793, %v825
        %v858 = vmul.f32 %v794, %v826
        %v859 = vmul.f32 %v795, %v827
        %v860 = vmul.f32 %v796, %v828
        %v861 = vmul.f32 %v797, %v829
        %v862 = vmul.f32 %v798, %v830
        %v863 = vmul.f32 %v799, %v831
        %v864 = vmul.f32 %v800, %v832
        %v865 = vmul.f32 %v801, %v833
        %v866 = vmul.f32 %v802, %v834
        %v867 = vmul.f32 %v803, %v835
        %v868 = vmul.f32 %v804, %v836
        %v869 = vmul.f32 %v805, %v837
        %v870 = vmul.f32 %v806, %v838
        %v871 = vmul.f32 %v807, %v839
        %872 = vst [vmem:[#allocation3] sm:$0xff] %v856
        %873 = vst [vmem:[#allocation3 + $0x8] sm:$0xff] %v857
        %874 = vst [vmem:[#allocation3 + $0x10] sm:$0xff] %v858
        %875 = vst [vmem:[#allocation3 + $0x18] sm:$0xff] %v859
        %876 = vst [vmem:[#allocation3 + $0x20] sm:$0xff] %v860
        %877 = vst [vmem:[#allocation3 + $0x28] sm:$0xff] %v861
        %878 = vst [vmem:[#allocation3 + $0x30] sm:$0xff] %v862
        %879 = vst [vmem:[#allocation3 + $0x38] sm:$0xff] %v863
        %880 = vst [vmem:[#allocation3 + $0x40] sm:$0xff] %v864
        %881 = vst [vmem:[#allocation3 + $0x48] sm:$0xff] %v865
        %882 = vst [vmem:[#allocation3 + $0x50] sm:$0xff] %v866
        %883 = vst [vmem:[#allocation3 + $0x58] sm:$0xff] %v867
        %884 = vst [vmem:[#allocation3 + $0x60] sm:$0xff] %v868
        %885 = vst [vmem:[#allocation3 + $0x68] sm:$0xff] %v869
        %886 = vst [vmem:[#allocation3 + $0x70] sm:$0xff] %v870
        %887 = vst [vmem:[#allocation3 + $0x78] sm:$0xff] %v871
        %v888 = vlaneseq
        %v889 = vshrl.u32 %v888, 7
        %v890 = vadd.s32 %v889, 80
        %891 = vset.pattern.permute.xlu0 %v890
        %892 = vperm.xlu0 %891, %v584
        %v893 = vpop.permute.xlu0 %892
        %v894 = vlaneseq
        %v895 = vshrl.u32 %v894, 7
        %v896 = vadd.s32 %v895, 80
        %897 = vset.pattern.permute.xlu0 %v896
        %898 = vperm.xlu0 %897, %v591
        %v899 = vpop.permute.xlu0 %898
        %v900 = vlaneseq
        %v901 = vshrl.u32 %v900, 7
        %v902 = vadd.s32 %v901, 80
        %903 = vset.pattern.permute.xlu0 %v902
        %904 = vperm.xlu0 %903, %v598
        %v905 = vpop.permute.xlu0 %904
        %v906 = vlaneseq
        %v907 = vshrl.u32 %v906, 7
        %v908 = vadd.s32 %v907, 80
        %909 = vset.pattern.permute.xlu0 %v908
        %910 = vperm.xlu0 %909, %v605
        %v911 = vpop.permute.xlu0 %910
        %v912 = vlaneseq
        %v913 = vshrl.u32 %v912, 7
        %v914 = vadd.s32 %v913, 80
        %915 = vset.pattern.permute.xlu0 %v914
        %916 = vperm.xlu0 %915, %v612
        %v917 = vpop.permute.xlu0 %916
        %v918 = vlaneseq
        %v919 = vshrl.u32 %v918, 7
        %v920 = vadd.s32 %v919, 80
        %921 = vset.pattern.permute.xlu0 %v920
        %922 = vperm.xlu0 %921, %v619
        %v923 = vpop.permute.xlu0 %922
        %v924 = vlaneseq
        %v925 = vshrl.u32 %v924, 7
        %v926 = vadd.s32 %v925, 80
        %927 = vset.pattern.permute.xlu0 %v926
        %928 = vperm.xlu0 %927, %v626
        %v929 = vpop.permute.xlu0 %928
        %v930 = vlaneseq
        %v931 = vshrl.u32 %v930, 7
        %v932 = vadd.s32 %v931, 80
        %933 = vset.pattern.permute.xlu0 %v932
        %934 = vperm.xlu0 %933, %v633
        %v935 = vpop.permute.xlu0 %934
        %v936 = vlaneseq
        %v937 = vshrl.u32 %v936, 7
        %v938 = vadd.s32 %v937, 80
        %939 = vset.pattern.permute.xlu0 %v938
        %940 = vperm.xlu0 %939, %v640
        %v941 = vpop.permute.xlu0 %940
        %v942 = vlaneseq
        %v943 = vshrl.u32 %v942, 7
        %v944 = vadd.s32 %v943, 80
        %945 = vset.pattern.permute.xlu0 %v944
        %946 = vperm.xlu0 %945, %v647
        %v947 = vpop.permute.xlu0 %946
        %v948 = vlaneseq
        %v949 = vshrl.u32 %v948, 7
        %v950 = vadd.s32 %v949, 80
        %951 = vset.pattern.permute.xlu0 %v950
        %952 = vperm.xlu0 %951, %v654
        %v953 = vpop.permute.xlu0 %952
        %v954 = vlaneseq
        %v955 = vshrl.u32 %v954, 7
        %v956 = vadd.s32 %v955, 80
        %957 = vset.pattern.permute.xlu0 %v956
        %958 = vperm.xlu0 %957, %v661
        %v959 = vpop.permute.xlu0 %958
        %v960 = vlaneseq
        %v961 = vshrl.u32 %v960, 7
        %v962 = vadd.s32 %v961, 80
        %963 = vset.pattern.permute.xlu0 %v962
        %964 = vperm.xlu0 %963, %v668
        %v965 = vpop.permute.xlu0 %964
        %v966 = vlaneseq
        %v967 = vshrl.u32 %v966, 7
        %v968 = vadd.s32 %v967, 80
        %969 = vset.pattern.permute.xlu0 %v968
        %970 = vperm.xlu0 %969, %v675
        %v971 = vpop.permute.xlu0 %970
        %v972 = vlaneseq
        %v973 = vshrl.u32 %v972, 7
        %v974 = vadd.s32 %v973, 80
        %975 = vset.pattern.permute.xlu0 %v974
        %976 = vperm.xlu0 %975, %v682
        %v977 = vpop.permute.xlu0 %976
        %v978 = vlaneseq
        %v979 = vshrl.u32 %v978, 7
        %v980 = vadd.s32 %v979, 80
        %981 = vset.pattern.permute.xlu0 %v980
        %982 = vperm.xlu0 %981, %v689
        %v983 = vpop.permute.xlu0 %982
        %v984 = vlaneseq
        %v985 = vshrl.u32 %v984, 7
        %v986 = vadd.s32 %v985, 88
        %987 = vset.pattern.permute.xlu0 %v986
        %988 = vperm.xlu0 %987, %v584
        %v989 = vpop.permute.xlu0 %988
        %v990 = vlaneseq
        %v991 = vshrl.u32 %v990, 7
        %v992 = vadd.s32 %v991, 88
        %993 = vset.pattern.permute.xlu0 %v992
        %994 = vperm.xlu0 %993, %v591
        %v995 = vpop.permute.xlu0 %994
        %v996 = vlaneseq
        %v997 = vshrl.u32 %v996, 7
        %v998 = vadd.s32 %v997, 88
        %999 = vset.pattern.permute.xlu0 %v998
        %1000 = vperm.xlu0 %999, %v598
        %v1001 = vpop.permute.xlu0 %1000
        %v1002 = vlaneseq
        %v1003 = vshrl.u32 %v1002, 7
        %v1004 = vadd.s32 %v1003, 88
        %1005 = vset.pattern.permute.xlu0 %v1004
        %1006 = vperm.xlu0 %1005, %v605
        %v1007 = vpop.permute.xlu0 %1006
        %v1008 = vlaneseq
        %v1009 = vshrl.u32 %v1008, 7
        %v1010 = vadd.s32 %v1009, 88
        %1011 = vset.pattern.permute.xlu0 %v1010
        %1012 = vperm.xlu0 %1011, %v612
        %v1013 = vpop.permute.xlu0 %1012
        %v1014 = vlaneseq
        %v1015 = vshrl.u32 %v1014, 7
        %v1016 = vadd.s32 %v1015, 88
        %1017 = vset.pattern.permute.xlu0 %v1016
        %1018 = vperm.xlu0 %1017, %v619
        %v1019 = vpop.permute.xlu0 %1018
        %v1020 = vlaneseq
        %v1021 = vshrl.u32 %v1020, 7
        %v1022 = vadd.s32 %v1021, 88
        %1023 = vset.pattern.permute.xlu0 %v1022
        %1024 = vperm.xlu0 %1023, %v626
        %v1025 = vpop.permute.xlu0 %1024
        %v1026 = vlaneseq
        %v1027 = vshrl.u32 %v1026, 7
        %v1028 = vadd.s32 %v1027, 88
        %1029 = vset.pattern.permute.xlu0 %v1028
        %1030 = vperm.xlu0 %1029, %v633
        %v1031 = vpop.permute.xlu0 %1030
        %v1032 = vlaneseq
        %v1033 = vshrl.u32 %v1032, 7
        %v1034 = vadd.s32 %v1033, 88
        %1035 = vset.pattern.permute.xlu0 %v1034
        %1036 = vperm.xlu0 %1035, %v640
        %v1037 = vpop.permute.xlu0 %1036
        %v1038 = vlaneseq
        %v1039 = vshrl.u32 %v1038, 7
        %v1040 = vadd.s32 %v1039, 88
        %1041 = vset.pattern.permute.xlu0 %v1040
        %1042 = vperm.xlu0 %1041, %v647
        %v1043 = vpop.permute.xlu0 %1042
        %v1044 = vlaneseq
        %v1045 = vshrl.u32 %v1044, 7
        %v1046 = vadd.s32 %v1045, 88
        %1047 = vset.pattern.permute.xlu0 %v1046
        %1048 = vperm.xlu0 %1047, %v654
        %v1049 = vpop.permute.xlu0 %1048
        %v1050 = vlaneseq
        %v1051 = vshrl.u32 %v1050, 7
        %v1052 = vadd.s32 %v1051, 88
        %1053 = vset.pattern.permute.xlu0 %v1052
        %1054 = vperm.xlu0 %1053, %v661
        %v1055 = vpop.permute.xlu0 %1054
        %v1056 = vlaneseq
        %v1057 = vshrl.u32 %v1056, 7
        %v1058 = vadd.s32 %v1057, 88
        %1059 = vset.pattern.permute.xlu0 %v1058
        %1060 = vperm.xlu0 %1059, %v668
        %v1061 = vpop.permute.xlu0 %1060
        %v1062 = vlaneseq
        %v1063 = vshrl.u32 %v1062, 7
        %v1064 = vadd.s32 %v1063, 88
        %1065 = vset.pattern.permute.xlu0 %v1064
        %1066 = vperm.xlu0 %1065, %v675
        %v1067 = vpop.permute.xlu0 %1066
        %v1068 = vlaneseq
        %v1069 = vshrl.u32 %v1068, 7
        %v1070 = vadd.s32 %v1069, 88
        %1071 = vset.pattern.permute.xlu0 %v1070
        %1072 = vperm.xlu0 %1071, %v682
        %v1073 = vpop.permute.xlu0 %1072
        %v1074 = vlaneseq
        %v1075 = vshrl.u32 %v1074, 7
        %v1076 = vadd.s32 %v1075, 88
        %1077 = vset.pattern.permute.xlu0 %v1076
        %1078 = vperm.xlu0 %1077, %v689
        %v1079 = vpop.permute.xlu0 %1078
        %v1080 = vsel %vm563, %v893, %v989
        %v1081 = vsel %vm563, %v899, %v995
        %v1082 = vsel %vm563, %v905, %v1001
        %v1083 = vsel %vm563, %v911, %v1007
        %v1084 = vsel %vm563, %v917, %v1013
        %v1085 = vsel %vm563, %v923, %v1019
        %v1086 = vsel %vm563, %v929, %v1025
        %v1087 = vsel %vm563, %v935, %v1031
        %v1088 = vsel %vm563, %v941, %v1037
        %v1089 = vsel %vm563, %v947, %v1043
        %v1090 = vsel %vm563, %v953, %v1049
        %v1091 = vsel %vm563, %v959, %v1055
        %v1092 = vsel %vm563, %v965, %v1061
        %v1093 = vsel %vm563, %v971, %v1067
        %v1094 = vsel %vm563, %v977, %v1073
        %v1095 = vsel %vm563, %v983, %v1079
        %v1096 = vld [vmem:[#allocation2] sm:$0x1]
        %v1097 = vperm.slane %v1096, 0
        %v1098 = vmul.f32 %v1097, 0.0
        %v1099 = vld [vmem:[#allocation3] sm:$0xff]
        %v1100 = vadd.f32 %v1098, %v1099
        %1101 = vst [vmem:[#allocation3] sm:$0xff] %v1100
        %v1102 = vld [vmem:[#allocation2 + $0x1] sm:$0x1]
        %v1103 = vperm.slane %v1102, 0
        %v1104 = vmul.f32 %v1100, %v1103
        %s1105 = scalar_lea.vmem [#allocation3], 8
        %v1106 = vld [vmem:[%s1105] sm:$0xff]
        %v1107 = vadd.f32 %v1104, %v1106
        %1108 = vst [vmem:[%s1105] sm:$0xff] %v1107
        %v1109 = vld [vmem:[#allocation2 + $0x2] sm:$0x1]
        %v1110 = vperm.slane %v1109, 0
        %v1111 = vmul.f32 %v1107, %v1110
        %s1112 = scalar_lea.vmem [#allocation3], 16
        %v1113 = vld [vmem:[%s1112] sm:$0xff]
        %v1114 = vadd.f32 %v1111, %v1113
        %1115 = vst [vmem:[%s1112] sm:$0xff] %v1114
        %v1116 = vld [vmem:[#allocation2 + $0x3] sm:$0x1]
        %v1117 = vperm.slane %v1116, 0
        %v1118 = vmul.f32 %v1114, %v1117
        %s1119 = scalar_lea.vmem [#allocation3], 24
        %v1120 = vld [vmem:[%s1119] sm:$0xff]
        %v1121 = vadd.f32 %v1118, %v1120
        %1122 = vst [vmem:[%s1119] sm:$0xff] %v1121
        %v1123 = vld [vmem:[#allocation2 + $0x4] sm:$0x1]
        %v1124 = vperm.slane %v1123, 0
        %v1125 = vmul.f32 %v1121, %v1124
        %s1126 = scalar_lea.vmem [#allocation3], 32
        %v1127 = vld [vmem:[%s1126] sm:$0xff]
        %v1128 = vadd.f32 %v1125, %v1127
        %1129 = vst [vmem:[%s1126] sm:$0xff] %v1128
        %v1130 = vld [vmem:[#allocation2 + $0x5] sm:$0x1]
        %v1131 = vperm.slane %v1130, 0
        %v1132 = vmul.f32 %v1128, %v1131
        %s1133 = scalar_lea.vmem [#allocation3], 40
        %v1134 = vld [vmem:[%s1133] sm:$0xff]
        %v1135 = vadd.f32 %v1132, %v1134
        %1136 = vst [vmem:[%s1133] sm:$0xff] %v1135
        %v1137 = vld [vmem:[#allocation2 + $0x6] sm:$0x1]
        %v1138 = vperm.slane %v1137, 0
        %v1139 = vmul.f32 %v1135, %v1138
        %s1140 = scalar_lea.vmem [#allocation3], 48
        %v1141 = vld [vmem:[%s1140] sm:$0xff]
        %v1142 = vadd.f32 %v1139, %v1141
        %1143 = vst [vmem:[%s1140] sm:$0xff] %v1142
        %v1144 = vld [vmem:[#allocation2 + $0x7] sm:$0x1]
        %v1145 = vperm.slane %v1144, 0
        %v1146 = vmul.f32 %v1142, %v1145
        %s1147 = scalar_lea.vmem [#allocation3], 56
        %v1148 = vld [vmem:[%s1147] sm:$0xff]
        %v1149 = vadd.f32 %v1146, %v1148
        %1150 = vst [vmem:[%s1147] sm:$0xff] %v1149
        %v1151 = vld [vmem:[#allocation2 + $0x8] sm:$0x1]
        %v1152 = vperm.slane %v1151, 0
        %v1153 = vmul.f32 %v1149, %v1152
        %s1154 = scalar_lea.vmem [#allocation3], 64
        %v1155 = vld [vmem:[%s1154] sm:$0xff]
        %v1156 = vadd.f32 %v1153, %v1155
        %1157 = vst [vmem:[%s1154] sm:$0xff] %v1156
        %v1158 = vld [vmem:[#allocation2 + $0x9] sm:$0x1]
        %v1159 = vperm.slane %v1158, 0
        %v1160 = vmul.f32 %v1156, %v1159
        %s1161 = scalar_lea.vmem [#allocation3], 72
        %v1162 = vld [vmem:[%s1161] sm:$0xff]
        %v1163 = vadd.f32 %v1160, %v1162
        %1164 = vst [vmem:[%s1161] sm:$0xff] %v1163
        %v1165 = vld [vmem:[#allocation2 + $0xa] sm:$0x1]
        %v1166 = vperm.slane %v1165, 0
        %v1167 = vmul.f32 %v1163, %v1166
        %s1168 = scalar_lea.vmem [#allocation3], 80
        %v1169 = vld [vmem:[%s1168] sm:$0xff]
        %v1170 = vadd.f32 %v1167, %v1169
        %1171 = vst [vmem:[%s1168] sm:$0xff] %v1170
        %v1172 = vld [vmem:[#allocation2 + $0xb] sm:$0x1]
        %v1173 = vperm.slane %v1172, 0
        %v1174 = vmul.f32 %v1170, %v1173
        %s1175 = scalar_lea.vmem [#allocation3], 88
        %v1176 = vld [vmem:[%s1175] sm:$0xff]
        %v1177 = vadd.f32 %v1174, %v1176
        %1178 = vst [vmem:[%s1175] sm:$0xff] %v1177
        %v1179 = vld [vmem:[#allocation2 + $0xc] sm:$0x1]
        %v1180 = vperm.slane %v1179, 0
        %v1181 = vmul.f32 %v1177, %v1180
        %s1182 = scalar_lea.vmem [#allocation3], 96
        %v1183 = vld [vmem:[%s1182] sm:$0xff]
        %v1184 = vadd.f32 %v1181, %v1183
        %1185 = vst [vmem:[%s1182] sm:$0xff] %v1184
        %v1186 = vld [vmem:[#allocation2 + $0xd] sm:$0x1]
        %v1187 = vperm.slane %v1186, 0
        %v1188 = vmul.f32 %v1184, %v1187
        %s1189 = scalar_lea.vmem [#allocation3], 104
        %v1190 = vld [vmem:[%s1189] sm:$0xff]
        %v1191 = vadd.f32 %v1188, %v1190
        %1192 = vst [vmem:[%s1189] sm:$0xff] %v1191
        %v1193 = vld [vmem:[#allocation2 + $0xe] sm:$0x1]
        %v1194 = vperm.slane %v1193, 0
        %v1195 = vmul.f32 %v1191, %v1194
        %s1196 = scalar_lea.vmem [#allocation3], 112
        %v1197 = vld [vmem:[%s1196] sm:$0xff]
        %v1198 = vadd.f32 %v1195, %v1197
        %1199 = vst [vmem:[%s1196] sm:$0xff] %v1198
        %v1200 = vld [vmem:[#allocation2 + $0xf] sm:$0x1]
        %v1201 = vperm.slane %v1200, 0
        %v1202 = vmul.f32 %v1198, %v1201
        %s1203 = scalar_lea.vmem [#allocation3], 120
        %v1204 = vld [vmem:[%s1203] sm:$0xff]
        %v1205 = vadd.f32 %v1202, %v1204
        %1206 = vst [vmem:[%s1203] sm:$0xff] %v1205
        %v1207 = vld [vmem:[#allocation3] sm:$0xff]
        %v1208 = vld [vmem:[#allocation3 + $0x8] sm:$0xff]
        %v1209 = vld [vmem:[#allocation3 + $0x10] sm:$0xff]
        %v1210 = vld [vmem:[#allocation3 + $0x18] sm:$0xff]
        %v1211 = vld [vmem:[#allocation3 + $0x20] sm:$0xff]
        %v1212 = vld [vmem:[#allocation3 + $0x28] sm:$0xff]
        %v1213 = vld [vmem:[#allocation3 + $0x30] sm:$0xff]
        %v1214 = vld [vmem:[#allocation3 + $0x38] sm:$0xff]
        %v1215 = vld [vmem:[#allocation3 + $0x40] sm:$0xff]
        %v1216 = vld [vmem:[#allocation3 + $0x48] sm:$0xff]
        %v1217 = vld [vmem:[#allocation3 + $0x50] sm:$0xff]
        %v1218 = vld [vmem:[#allocation3 + $0x58] sm:$0xff]
        %v1219 = vld [vmem:[#allocation3 + $0x60] sm:$0xff]
        %v1220 = vld [vmem:[#allocation3 + $0x68] sm:$0xff]
        %v1221 = vld [vmem:[#allocation3 + $0x70] sm:$0xff]
        %v1222 = vld [vmem:[#allocation3 + $0x78] sm:$0xff]
        %v1223 = vmul.f32 %v1207, %v1080
        %v1224 = vmul.f32 %v1208, %v1081
        %v1225 = vmul.f32 %v1209, %v1082
        %v1226 = vmul.f32 %v1210, %v1083
        %v1227 = vmul.f32 %v1211, %v1084
        %v1228 = vmul.f32 %v1212, %v1085
        %v1229 = vmul.f32 %v1213, %v1086
        %v1230 = vmul.f32 %v1214, %v1087
        %v1231 = vmul.f32 %v1215, %v1088
        %v1232 = vmul.f32 %v1216, %v1089
        %v1233 = vmul.f32 %v1217, %v1090
        %v1234 = vmul.f32 %v1218, %v1091
        %v1235 = vmul.f32 %v1219, %v1092
        %v1236 = vmul.f32 %v1220, %v1093
        %v1237 = vmul.f32 %v1221, %v1094
        %v1238 = vmul.f32 %v1222, %v1095
        %v1239 = vrot.slane %v1223, 4
        %v1240 = vadd.f32 %v1223, %v1239
        %v1241 = vrot.slane %v1240, 2
        %v1242 = vadd.f32 %v1240, %v1241
        %v1243 = vrot.slane %v1242, 1
        %v1244 = vadd.f32 %v1242, %v1243
        %v1245 = vrot.slane %v1224, 4
        %v1246 = vadd.f32 %v1224, %v1245
        %v1247 = vrot.slane %v1246, 2
        %v1248 = vadd.f32 %v1246, %v1247
        %v1249 = vrot.slane %v1248, 1
        %v1250 = vadd.f32 %v1248, %v1249
        %v1251 = vrot.slane %v1225, 4
        %v1252 = vadd.f32 %v1225, %v1251
        %v1253 = vrot.slane %v1252, 2
        %v1254 = vadd.f32 %v1252, %v1253
        %v1255 = vrot.slane %v1254, 1
        %v1256 = vadd.f32 %v1254, %v1255
        %v1257 = vrot.slane %v1226, 4
        %v1258 = vadd.f32 %v1226, %v1257
        %v1259 = vrot.slane %v1258, 2
        %v1260 = vadd.f32 %v1258, %v1259
        %v1261 = vrot.slane %v1260, 1
        %v1262 = vadd.f32 %v1260, %v1261
        %v1263 = vrot.slane %v1227, 4
        %v1264 = vadd.f32 %v1227, %v1263
        %v1265 = vrot.slane %v1264, 2
        %v1266 = vadd.f32 %v1264, %v1265
        %v1267 = vrot.slane %v1266, 1
        %v1268 = vadd.f32 %v1266, %v1267
        %v1269 = vrot.slane %v1228, 4
        %v1270 = vadd.f32 %v1228, %v1269
        %v1271 = vrot.slane %v1270, 2
        %v1272 = vadd.f32 %v1270, %v1271
        %v1273 = vrot.slane %v1272, 1
        %v1274 = vadd.f32 %v1272, %v1273
        %v1275 = vrot.slane %v1229, 4
        %v1276 = vadd.f32 %v1229, %v1275
        %v1277 = vrot.slane %v1276, 2
        %v1278 = vadd.f32 %v1276, %v1277
        %v1279 = vrot.slane %v1278, 1
        %v1280 = vadd.f32 %v1278, %v1279
        %v1281 = vrot.slane %v1230, 4
        %v1282 = vadd.f32 %v1230, %v1281
        %v1283 = vrot.slane %v1282, 2
        %v1284 = vadd.f32 %v1282, %v1283
        %v1285 = vrot.slane %v1284, 1
        %v1286 = vadd.f32 %v1284, %v1285
        %v1287 = vrot.slane %v1231, 4
        %v1288 = vadd.f32 %v1231, %v1287
        %v1289 = vrot.slane %v1288, 2
        %v1290 = vadd.f32 %v1288, %v1289
        %v1291 = vrot.slane %v1290, 1
        %v1292 = vadd.f32 %v1290, %v1291
        %v1293 = vrot.slane %v1232, 4
        %v1294 = vadd.f32 %v1232, %v1293
        %v1295 = vrot.slane %v1294, 2
        %v1296 = vadd.f32 %v1294, %v1295
        %v1297 = vrot.slane %v1296, 1
        %v1298 = vadd.f32 %v1296, %v1297
        %v1299 = vrot.slane %v1233, 4
        %v1300 = vadd.f32 %v1233, %v1299
        %v1301 = vrot.slane %v1300, 2
        %v1302 = vadd.f32 %v1300, %v1301
        %v1303 = vrot.slane %v1302, 1
        %v1304 = vadd.f32 %v1302, %v1303
        %v1305 = vrot.slane %v1234, 4
        %v1306 = vadd.f32 %v1234, %v1305
        %v1307 = vrot.slane %v1306, 2
        %v1308 = vadd.f32 %v1306, %v1307
        %v1309 = vrot.slane %v1308, 1
        %v1310 = vadd.f32 %v1308, %v1309
        %v1311 = vrot.slane %v1235, 4
        %v1312 = vadd.f32 %v1235, %v1311
        %v1313 = vrot.slane %v1312, 2
        %v1314 = vadd.f32 %v1312, %v1313
        %v1315 = vrot.slane %v1314, 1
        %v1316 = vadd.f32 %v1314, %v1315
        %v1317 = vrot.slane %v1236, 4
        %v1318 = vadd.f32 %v1236, %v1317
        %v1319 = vrot.slane %v1318, 2
        %v1320 = vadd.f32 %v1318, %v1319
        %v1321 = vrot.slane %v1320, 1
        %v1322 = vadd.f32 %v1320, %v1321
        %v1323 = vrot.slane %v1237, 4
        %v1324 = vadd.f32 %v1237, %v1323
        %v1325 = vrot.slane %v1324, 2
        %v1326 = vadd.f32 %v1324, %v1325
        %v1327 = vrot.slane %v1326, 1
        %v1328 = vadd.f32 %v1326, %v1327
        %v1329 = vrot.slane %v1238, 4
        %v1330 = vadd.f32 %v1238, %v1329
        %v1331 = vrot.slane %v1330, 2
        %v1332 = vadd.f32 %v1330, %v1331
        %v1333 = vrot.slane %v1332, 1
        %v1334 = vadd.f32 %v1332, %v1333
        %1351 = vrot.lane.b32.xlu0 %v1244, 64
        %v1352 = vpop.permute.xlu0 %1351
        %1353 = vrot.lane.b32.xlu0 %v1250, 64
        %v1354 = vpop.permute.xlu0 %1353
        %1355 = vrot.lane.b32.xlu0 %v1256, 64
        %v1356 = vpop.permute.xlu0 %1355
        %1357 = vrot.lane.b32.xlu0 %v1262, 64
        %v1358 = vpop.permute.xlu0 %1357
        %1359 = vrot.lane.b32.xlu0 %v1268, 64
        %v1360 = vpop.permute.xlu0 %1359
        %1361 = vrot.lane.b32.xlu0 %v1274, 64
        %v1362 = vpop.permute.xlu0 %1361
        %1363 = vrot.lane.b32.xlu0 %v1280, 64
        %v1364 = vpop.permute.xlu0 %1363
        %1365 = vrot.lane.b32.xlu0 %v1286, 64
        %v1366 = vpop.permute.xlu0 %1365
        %1367 = vrot.lane.b32.xlu0 %v1292, 64
        %v1368 = vpop.permute.xlu0 %1367
        %1369 = vrot.lane.b32.xlu0 %v1298, 64
        %v1370 = vpop.permute.xlu0 %1369
        %1371 = vrot.lane.b32.xlu0 %v1304, 64
        %v1372 = vpop.permute.xlu0 %1371
        %1373 = vrot.lane.b32.xlu0 %v1310, 64
        %v1374 = vpop.permute.xlu0 %1373
        %1375 = vrot.lane.b32.xlu0 %v1316, 64
        %v1376 = vpop.permute.xlu0 %1375
        %1377 = vrot.lane.b32.xlu0 %v1322, 64
        %v1378 = vpop.permute.xlu0 %1377
        %1379 = vrot.lane.b32.xlu0 %v1328, 64
        %v1380 = vpop.permute.xlu0 %1379
        %1381 = vrot.lane.b32.xlu0 %v1334, 64
        %v1382 = vpop.permute.xlu0 %1381
        %v1399 = vadd.f32 %v1244, %v1352
        %v1400 = vadd.f32 %v1250, %v1354
        %v1401 = vadd.f32 %v1256, %v1356
        %v1402 = vadd.f32 %v1262, %v1358
        %v1403 = vadd.f32 %v1268, %v1360
        %v1404 = vadd.f32 %v1274, %v1362
        %v1405 = vadd.f32 %v1280, %v1364
        %v1406 = vadd.f32 %v1286, %v1366
        %v1407 = vadd.f32 %v1292, %v1368
        %v1408 = vadd.f32 %v1298, %v1370
        %v1409 = vadd.f32 %v1304, %v1372
        %v1410 = vadd.f32 %v1310, %v1374
        %v1411 = vadd.f32 %v1316, %v1376
        %v1412 = vadd.f32 %v1322, %v1378
        %v1413 = vadd.f32 %v1328, %v1380
        %v1414 = vadd.f32 %v1334, %v1382
        %v1415 = vld [vmem:[%s6] sm:$0x1]
        %v1417 = vperm.slane %v1415, 0
        %v1419 = vmul.f32 %v1417, %v487
        %v1420 = vmul.f32 %v1417, %v488
        %v1423 = vrot.slane %v1419, 1
        %v1424 = vrot.slane %v1419, 2
        %v1425 = vrot.slane %v1419, 3
        %v1426 = vrot.slane %v1419, 4
        %v1427 = vrot.slane %v1419, 5
        %v1428 = vrot.slane %v1419, 6
        %v1429 = vrot.slane %v1419, 7
        %v1430 = vrot.slane %v1420, 1
        %v1431 = vrot.slane %v1420, 2
        %v1432 = vrot.slane %v1420, 3
        %v1433 = vrot.slane %v1420, 4
        %v1434 = vrot.slane %v1420, 5
        %v1435 = vrot.slane %v1420, 6
        %v1436 = vrot.slane %v1420, 7
        %v1453 = vadd.f32 %v1399, %v1419
        %v1454 = vadd.f32 %v1400, %v1423
        %v1455 = vadd.f32 %v1401, %v1424
        %v1456 = vadd.f32 %v1402, %v1425
        %v1457 = vadd.f32 %v1403, %v1426
        %v1458 = vadd.f32 %v1404, %v1427
        %v1459 = vadd.f32 %v1405, %v1428
        %v1460 = vadd.f32 %v1406, %v1429
        %v1461 = vadd.f32 %v1407, %v1420
        %v1462 = vadd.f32 %v1408, %v1430
        %v1463 = vadd.f32 %v1409, %v1431
        %v1464 = vadd.f32 %v1410, %v1432
        %v1465 = vadd.f32 %v1411, %v1433
        %v1466 = vadd.f32 %v1412, %v1434
        %v1467 = vadd.f32 %v1413, %v1435
        %v1468 = vadd.f32 %v1414, %v1436
        %v1469 = vxor.u32 %v366, 2147483648
        %v1470 = vxor.u32 %v389, 2147483648
        %v1471 = vxor.u32 %v369, 2147483648
        %v1472 = vxor.u32 %v392, 2147483648
        %v1473 = vmul.f32 %v1469, 1.442695
        %v1474 = vpow.pop %v1473
        %v1475 = vmul.f32 %v1470, 1.442695
        %v1476 = vpow.pop %v1475
        %v1477 = vmul.f32 %v1471, 1.442695
        %v1478 = vpow.pop %v1477
        %v1479 = vmul.f32 %v1472, 1.442695
        %v1480 = vpow.pop %v1479
        %v1481 = vadd.f32 %v1474, 1.0
        %v1482 = vadd.f32 %v1476, 1.0
        %v1483 = vadd.f32 %v1478, 1.0
        %v1484 = vadd.f32 %v1480, 1.0
        %v1485 = vrcp.pop %v1481
        %v1486 = vmul.f32 %v1481, %v1485
        %v1487 = vsub.f32 1.0, %v1486
        %v1488 = vmul.f32 %v1485, %v1487
        %v1489 = vadd.f32 %v1485, %v1488
        %vm1490 = vweird.f32 %v1481
        %vm1491 = vweird.f32 %v1485
        %vm1492 = vmor %vm1490, %vm1491
        %v1493 = vsel %vm1492, %v1485, %v1489
        %v1494 = vand.u32 2147483647, %v1481
        %vm1495 = vcmp.eq.f32.partialorder %v1494, 8.507059e+37
        %v1496 = vand.u32 %v1481, 2147483648
        %v1497 = vor.u32 1.1754944e-38, %v1496
        %v1498 = vsel %vm1495, %v1497, %v1493
        %v1499 = vmul.f32 1.0, %v1498
        %v1500 = vrcp.pop %v1482
        %v1501 = vmul.f32 %v1482, %v1500
        %v1502 = vsub.f32 1.0, %v1501
        %v1503 = vmul.f32 %v1500, %v1502
        %v1504 = vadd.f32 %v1500, %v1503
        %vm1505 = vweird.f32 %v1482
        %vm1506 = vweird.f32 %v1500
        %vm1507 = vmor %vm1505, %vm1506
        %v1508 = vsel %vm1507, %v1500, %v1504
        %v1509 = vand.u32 2147483647, %v1482
        %vm1510 = vcmp.eq.f32.partialorder %v1509, 8.507059e+37
        %v1511 = vand.u32 %v1482, 2147483648
        %v1512 = vor.u32 1.1754944e-38, %v1511
        %v1513 = vsel %vm1510, %v1512, %v1508
        %v1514 = vmul.f32 1.0, %v1513
        %v1515 = vrcp.pop %v1483
        %v1516 = vmul.f32 %v1483, %v1515
        %v1517 = vsub.f32 1.0, %v1516
        %v1518 = vmul.f32 %v1515, %v1517
        %v1519 = vadd.f32 %v1515, %v1518
        %vm1520 = vweird.f32 %v1483
        %vm1521 = vweird.f32 %v1515
        %vm1522 = vmor %vm1520, %vm1521
        %v1523 = vsel %vm1522, %v1515, %v1519
        %v1524 = vand.u32 2147483647, %v1483
        %vm1525 = vcmp.eq.f32.partialorder %v1524, 8.507059e+37
        %v1526 = vand.u32 %v1483, 2147483648
        %v1527 = vor.u32 1.1754944e-38, %v1526
        %v1528 = vsel %vm1525, %v1527, %v1523
        %v1529 = vmul.f32 1.0, %v1528
        %v1530 = vrcp.pop %v1484
        %v1531 = vmul.f32 %v1484, %v1530
        %v1532 = vsub.f32 1.0, %v1531
        %v1533 = vmul.f32 %v1530, %v1532
        %v1534 = vadd.f32 %v1530, %v1533
        %vm1535 = vweird.f32 %v1484
        %vm1536 = vweird.f32 %v1530
        %vm1537 = vmor %vm1535, %vm1536
        %v1538 = vsel %vm1537, %v1530, %v1534
        %v1539 = vand.u32 2147483647, %v1484
        %vm1540 = vcmp.eq.f32.partialorder %v1539, 8.507059e+37
        %v1541 = vand.u32 %v1484, 2147483648
        %v1542 = vor.u32 1.1754944e-38, %v1541
        %v1543 = vsel %vm1540, %v1542, %v1538
        %v1544 = vmul.f32 1.0, %v1543
        %v1545 = vmul.f32 %v366, %v1499
        %v1546 = vmul.f32 %v389, %v1514
        %v1547 = vmul.f32 %v369, %v1529
        %v1548 = vmul.f32 %v392, %v1544
        %v1553 = vrot.slane %v1545, 1
        %v1554 = vrot.slane %v1546, 1
        %v1555 = vrot.slane %v1545, 2
        %v1556 = vrot.slane %v1546, 2
        %v1557 = vrot.slane %v1545, 3
        %v1558 = vrot.slane %v1546, 3
        %v1559 = vrot.slane %v1545, 4
        %v1560 = vrot.slane %v1546, 4
        %v1561 = vrot.slane %v1545, 5
        %v1562 = vrot.slane %v1546, 5
        %v1563 = vrot.slane %v1545, 6
        %v1564 = vrot.slane %v1546, 6
        %v1565 = vrot.slane %v1545, 7
        %v1566 = vrot.slane %v1546, 7
        %v1567 = vrot.slane %v1547, 1
        %v1568 = vrot.slane %v1548, 1
        %v1569 = vrot.slane %v1547, 2
        %v1570 = vrot.slane %v1548, 2
        %v1571 = vrot.slane %v1547, 3
        %v1572 = vrot.slane %v1548, 3
        %v1573 = vrot.slane %v1547, 4
        %v1574 = vrot.slane %v1548, 4
        %v1575 = vrot.slane %v1547, 5
        %v1576 = vrot.slane %v1548, 5
        %v1577 = vrot.slane %v1547, 6
        %v1578 = vrot.slane %v1548, 6
        %v1579 = vrot.slane %v1547, 7
        %v1580 = vrot.slane %v1548, 7
        %1581 = vrot.lane.b32.xlu0 %v1545, 32
        %v1582 = vpop.permute.xlu0 %1581
        %1583 = vrot.lane.b32.xlu0 %v1546, 32
        %v1584 = vpop.permute.xlu0 %1583
        %1585 = vrot.lane.b32.xlu0 %v1553, 32
        %v1586 = vpop.permute.xlu0 %1585
        %1587 = vrot.lane.b32.xlu0 %v1554, 32
        %v1588 = vpop.permute.xlu0 %1587
        %1589 = vrot.lane.b32.xlu0 %v1555, 32
        %v1590 = vpop.permute.xlu0 %1589
        %1591 = vrot.lane.b32.xlu0 %v1556, 32
        %v1592 = vpop.permute.xlu0 %1591
        %1593 = vrot.lane.b32.xlu0 %v1557, 32
        %v1594 = vpop.permute.xlu0 %1593
        %1595 = vrot.lane.b32.xlu0 %v1558, 32
        %v1596 = vpop.permute.xlu0 %1595
        %1597 = vrot.lane.b32.xlu0 %v1559, 32
        %v1598 = vpop.permute.xlu0 %1597
        %1599 = vrot.lane.b32.xlu0 %v1560, 32
        %v1600 = vpop.permute.xlu0 %1599
        %1601 = vrot.lane.b32.xlu0 %v1561, 32
        %v1602 = vpop.permute.xlu0 %1601
        %1603 = vrot.lane.b32.xlu0 %v1562, 32
        %v1604 = vpop.permute.xlu0 %1603
        %1605 = vrot.lane.b32.xlu0 %v1563, 32
        %v1606 = vpop.permute.xlu0 %1605
        %1607 = vrot.lane.b32.xlu0 %v1564, 32
        %v1608 = vpop.permute.xlu0 %1607
        %1609 = vrot.lane.b32.xlu0 %v1565, 32
        %v1610 = vpop.permute.xlu0 %1609
        %1611 = vrot.lane.b32.xlu0 %v1566, 32
        %v1612 = vpop.permute.xlu0 %1611
        %1613 = vrot.lane.b32.xlu0 %v1547, 32
        %v1614 = vpop.permute.xlu0 %1613
        %1615 = vrot.lane.b32.xlu0 %v1548, 32
        %v1616 = vpop.permute.xlu0 %1615
        %1617 = vrot.lane.b32.xlu0 %v1567, 32
        %v1618 = vpop.permute.xlu0 %1617
        %1619 = vrot.lane.b32.xlu0 %v1568, 32
        %v1620 = vpop.permute.xlu0 %1619
        %1621 = vrot.lane.b32.xlu0 %v1569, 32
        %v1622 = vpop.permute.xlu0 %1621
        %1623 = vrot.lane.b32.xlu0 %v1570, 32
        %v1624 = vpop.permute.xlu0 %1623
        %1625 = vrot.lane.b32.xlu0 %v1571, 32
        %v1626 = vpop.permute.xlu0 %1625
        %1627 = vrot.lane.b32.xlu0 %v1572, 32
        %v1628 = vpop.permute.xlu0 %1627
        %1629 = vrot.lane.b32.xlu0 %v1573, 32
        %v1630 = vpop.permute.xlu0 %1629
        %1631 = vrot.lane.b32.xlu0 %v1574, 32
        %v1632 = vpop.permute.xlu0 %1631
        %1633 = vrot.lane.b32.xlu0 %v1575, 32
        %v1634 = vpop.permute.xlu0 %1633
        %1635 = vrot.lane.b32.xlu0 %v1576, 32
        %v1636 = vpop.permute.xlu0 %1635
        %1637 = vrot.lane.b32.xlu0 %v1577, 32
        %v1638 = vpop.permute.xlu0 %1637
        %1639 = vrot.lane.b32.xlu0 %v1578, 32
        %v1640 = vpop.permute.xlu0 %1639
        %1641 = vrot.lane.b32.xlu0 %v1579, 32
        %v1642 = vpop.permute.xlu0 %1641
        %1643 = vrot.lane.b32.xlu0 %v1580, 32
        %v1644 = vpop.permute.xlu0 %1643
        %v1645 = vsel %vm341, %v1582, %v1584
        %v1646 = vsel %vm341, %v1586, %v1588
        %v1647 = vsel %vm341, %v1590, %v1592
        %v1648 = vsel %vm341, %v1594, %v1596
        %v1649 = vsel %vm341, %v1598, %v1600
        %v1650 = vsel %vm341, %v1602, %v1604
        %v1651 = vsel %vm341, %v1606, %v1608
        %v1652 = vsel %vm341, %v1610, %v1612
        %v1653 = vsel %vm341, %v1614, %v1616
        %v1654 = vsel %vm341, %v1618, %v1620
        %v1655 = vsel %vm341, %v1622, %v1624
        %v1656 = vsel %vm341, %v1626, %v1628
        %v1657 = vsel %vm341, %v1630, %v1632
        %v1658 = vsel %vm341, %v1634, %v1636
        %v1659 = vsel %vm341, %v1638, %v1640
        %v1660 = vsel %vm341, %v1642, %v1644
        %v1677 = vmul.f32 %v1453, %v1645
        %v1678 = vmul.f32 %v1454, %v1646
        %v1679 = vmul.f32 %v1455, %v1647
        %v1680 = vmul.f32 %v1456, %v1648
        %v1681 = vmul.f32 %v1457, %v1649
        %v1682 = vmul.f32 %v1458, %v1650
        %v1683 = vmul.f32 %v1459, %v1651
        %v1684 = vmul.f32 %v1460, %v1652
        %v1685 = vmul.f32 %v1461, %v1653
        %v1686 = vmul.f32 %v1462, %v1654
        %v1687 = vmul.f32 %v1463, %v1655
        %v1688 = vmul.f32 %v1464, %v1656
        %v1689 = vmul.f32 %v1465, %v1657
        %v1690 = vmul.f32 %v1466, %v1658
        %v1691 = vmul.f32 %v1467, %v1659
        %v1692 = vmul.f32 %v1468, %v1660
        %v1693 = vmul.f32 %v1677, %v1677
        %v1694 = vmul.f32 %v1678, %v1678
        %v1695 = vmul.f32 %v1679, %v1679
        %v1696 = vmul.f32 %v1680, %v1680
        %v1697 = vmul.f32 %v1681, %v1681
        %v1698 = vmul.f32 %v1682, %v1682
        %v1699 = vmul.f32 %v1683, %v1683
        %v1700 = vmul.f32 %v1684, %v1684
        %v1701 = vmul.f32 %v1685, %v1685
        %v1702 = vmul.f32 %v1686, %v1686
        %v1703 = vmul.f32 %v1687, %v1687
        %v1704 = vmul.f32 %v1688, %v1688
        %v1705 = vmul.f32 %v1689, %v1689
        %v1706 = vmul.f32 %v1690, %v1690
        %v1707 = vmul.f32 %v1691, %v1691
        %v1708 = vmul.f32 %v1692, %v1692
        %v1725 = vrot.slane %v1694, 7
        %vm1726 = vcmask 1041409
        %v1727 = vsel %vm1726, %v1725, %v1693
        %v1728 = vrot.slane %v1695, 6
        %vm1729 = vcmask 1042434
        %v1730 = vsel %vm1729, %v1728, %v1727
        %v1731 = vrot.slane %v1696, 5
        %vm1732 = vcmask 1043459
        %v1733 = vsel %vm1732, %v1731, %v1730
        %v1734 = vrot.slane %v1697, 4
        %vm1735 = vcmask 1044484
        %v1736 = vsel %vm1735, %v1734, %v1733
        %v1737 = vrot.slane %v1698, 3
        %vm1738 = vcmask 1045509
        %v1739 = vsel %vm1738, %v1737, %v1736
        %v1740 = vrot.slane %v1699, 2
        %vm1741 = vcmask 1046534
        %v1742 = vsel %vm1741, %v1740, %v1739
        %v1743 = vrot.slane %v1700, 1
        %vm1744 = vcmask 1047559
        %v1745 = vsel %vm1744, %v1743, %v1742
        %v1746 = vrot.slane %v1702, 7
        %v1747 = vsel %vm1726, %v1746, %v1701
        %v1748 = vrot.slane %v1703, 6
        %v1749 = vsel %vm1729, %v1748, %v1747
        %v1750 = vrot.slane %v1704, 5
        %v1751 = vsel %vm1732, %v1750, %v1749
        %v1752 = vrot.slane %v1705, 4
        %v1753 = vsel %vm1735, %v1752, %v1751
        %v1754 = vrot.slane %v1706, 3
        %v1755 = vsel %vm1738, %v1754, %v1753
        %v1756 = vrot.slane %v1707, 2
        %v1757 = vsel %vm1741, %v1756, %v1755
        %v1758 = vrot.slane %v1708, 1
        %v1759 = vsel %vm1744, %v1758, %v1757
        %v1762 = vsel %vm563, %v1745, 0.0
        %1763 = vadd.xlane.f32.xlu0 %v1762
        %v1764 = vpop.xlane.xlu0 %1763
        %v1765 = vsel %vm563, %v1759, 0.0
        %1766 = vadd.xlane.f32.xlu0 %v1765
        %v1767 = vpop.xlane.xlu0 %1766
        %v1768 = vrcp.pop 64.0
        %v1769 = vmul.f32 64.0, %v1768
        %v1770 = vsub.f32 1.0, %v1769
        %v1771 = vmul.f32 %v1768, %v1770
        %v1772 = vadd.f32 %v1768, %v1771
        %vm1773 = vweird.f32 %v1768
        %v1774 = vsel %vm1773, %v1768, %v1772
        %v1775 = vmul.f32 %v1764, %v1774
        %v1776 = vmul.f32 %v1767, %v1774
        %v1777 = vadd.f32 %v1775, 1e-05
        %v1778 = vadd.f32 %v1776, 1e-05
        %v1779 = vrsqrt.pop %v1777
        %v1780 = vmul.f32 %v1779, %v1777
        %v1781 = vmul.f32 %v1780, %v1779
        %v1782 = vmul.f32 0.5, %v1781
        %v1783 = vsub.f32 1.5, %v1782
        %v1784 = vmul.f32 %v1779, %v1783
        %vm1785 = vweird.f32 %v1777
        %vm1786 = vweird.f32 %v1779
        %vm1787 = vmor %vm1785, %vm1786
        %v1788 = vsel %vm1787, %v1779, %v1784
        %v1789 = vrsqrt.pop %v1778
        %v1790 = vmul.f32 %v1789, %v1778
        %v1791 = vmul.f32 %v1790, %v1789
        %v1792 = vmul.f32 0.5, %v1791
        %v1793 = vsub.f32 1.5, %v1792
        %v1794 = vmul.f32 %v1789, %v1793
        %vm1795 = vweird.f32 %v1778
        %vm1796 = vweird.f32 %v1789
        %vm1797 = vmor %vm1795, %vm1796
        %v1798 = vsel %vm1797, %v1789, %v1794
        %v1801 = vrot.slane %v1788, 1
        %v1802 = vrot.slane %v1788, 2
        %v1803 = vrot.slane %v1788, 3
        %v1804 = vrot.slane %v1788, 4
        %v1805 = vrot.slane %v1788, 5
        %v1806 = vrot.slane %v1788, 6
        %v1807 = vrot.slane %v1788, 7
        %v1808 = vrot.slane %v1798, 1
        %v1809 = vrot.slane %v1798, 2
        %v1810 = vrot.slane %v1798, 3
        %v1811 = vrot.slane %v1798, 4
        %v1812 = vrot.slane %v1798, 5
        %v1813 = vrot.slane %v1798, 6
        %v1814 = vrot.slane %v1798, 7
        %v1831 = vmul.f32 %v1677, %v1788
        %v1832 = vmul.f32 %v1678, %v1801
        %v1833 = vmul.f32 %v1679, %v1802
        %v1834 = vmul.f32 %v1680, %v1803
        %v1835 = vmul.f32 %v1681, %v1804
        %v1836 = vmul.f32 %v1682, %v1805
        %v1837 = vmul.f32 %v1683, %v1806
        %v1838 = vmul.f32 %v1684, %v1807
        %v1839 = vmul.f32 %v1685, %v1798
        %v1840 = vmul.f32 %v1686, %v1808
        %v1841 = vmul.f32 %v1687, %v1809
        %v1842 = vmul.f32 %v1688, %v1810
        %v1843 = vmul.f32 %v1689, %v1811
        %v1844 = vmul.f32 %v1690, %v1812
        %v1845 = vmul.f32 %v1691, %v1813
        %v1846 = vmul.f32 %v1692, %v1814
        %v1847 = vld [vmem:[%s7] sm:$0x1]
        %v1849 = vperm.slane %v1847, 0
        %v1851 = vmul.f32 %v1831, %v1849
        %v1852 = vmul.f32 %v1832, %v1849
        %v1853 = vmul.f32 %v1833, %v1849
        %v1854 = vmul.f32 %v1834, %v1849
        %v1855 = vmul.f32 %v1835, %v1849
        %v1856 = vmul.f32 %v1836, %v1849
        %v1857 = vmul.f32 %v1837, %v1849
        %v1858 = vmul.f32 %v1838, %v1849
        %v1859 = vmul.f32 %v1839, %v1849
        %v1860 = vmul.f32 %v1840, %v1849
        %v1861 = vmul.f32 %v1841, %v1849
        %v1862 = vmul.f32 %v1842, %v1849
        %v1863 = vmul.f32 %v1843, %v1849
        %v1864 = vmul.f32 %v1844, %v1849
        %v1865 = vmul.f32 %v1845, %v1849
        %v1866 = vmul.f32 %v1846, %v1849
        %v1867 = vld [vmem:[%s8] sm:$0xff]
        %v1868 = vld [vmem:[%s8 + $0x8] sm:$0xff]
        %v1869 = vld [vmem:[%s8 + $0x10] sm:$0xff]
        %v1870 = vld [vmem:[%s8 + $0x18] sm:$0xff]
        %v1871 = vld [vmem:[%s8 + $0x20] sm:$0xff]
        %v1872 = vld [vmem:[%s8 + $0x28] sm:$0xff]
        %v1873 = vld [vmem:[%s8 + $0x30] sm:$0xff]
        %v1874 = vld [vmem:[%s8 + $0x38] sm:$0xff]
        %v1891 = vrot.slane %v1852, 7
        %v1892 = vsel %vm1726, %v1891, %v1851
        %v1893 = vrot.slane %v1853, 6
        %v1894 = vsel %vm1729, %v1893, %v1892
        %v1895 = vrot.slane %v1854, 5
        %v1896 = vsel %vm1732, %v1895, %v1894
        %v1897 = vrot.slane %v1855, 4
        %v1898 = vsel %vm1735, %v1897, %v1896
        %v1899 = vrot.slane %v1856, 3
        %v1900 = vsel %vm1738, %v1899, %v1898
        %v1901 = vrot.slane %v1857, 2
        %v1902 = vsel %vm1741, %v1901, %v1900
        %v1903 = vrot.slane %v1858, 1
        %v1904 = vsel %vm1744, %v1903, %v1902
        %v1905 = vrot.slane %v1860, 7
        %v1906 = vsel %vm1726, %v1905, %v1859
        %v1907 = vrot.slane %v1861, 6
        %v1908 = vsel %vm1729, %v1907, %v1906
        %v1909 = vrot.slane %v1862, 5
        %v1910 = vsel %vm1732, %v1909, %v1908
        %v1911 = vrot.slane %v1863, 4
        %v1912 = vsel %vm1735, %v1911, %v1910
        %v1913 = vrot.slane %v1864, 3
        %v1914 = vsel %vm1738, %v1913, %v1912
        %v1915 = vrot.slane %v1865, 2
        %v1916 = vsel %vm1741, %v1915, %v1914
        %v1917 = vrot.slane %v1866, 1
        %v1918 = vsel %vm1744, %v1917, %v1916
        %v1919 = vsel %vm563, %v1904, 0
        %v1921 = vsel %vm563, %v1918, 0
        %1923 = vmatpush.msra.mxu0 0.0
        %1924 = vmatpush.msra.mxu0 0.0
        %1925 = vmatpush.msra.mxu0 0.0
        %1926 = vmatpush.msra.mxu0 0.0
        %1927 = vmatpush.msra.mxu0 0.0
        %1928 = vmatpush.msra.mxu0 0.0
        %1929 = vmatpush.msra.mxu0 0.0
        %1930 = vmatpush.msra.mxu0 0.0
        %1931 = vmatpush.msra.mxu0 %v1874
        %1932 = vmatpush.msra.mxu0 %v1873
        %1933 = vmatpush.msra.mxu0 %v1872
        %1934 = vmatpush.msra.mxu0 %v1871
        %1935 = vmatpush.msra.mxu0 %v1870
        %1936 = vmatpush.msra.mxu0 %v1869
        %1937 = vmatpush.msra.mxu0 %v1868
        %1938 = vmatpush.msra.mxu0 %v1867
        %1939 = vmatmul.f32.gmra.mxu0 %v1919
        %v1940 = vpop.f32.mrf.mxu0
        %v1941 = vadd.f32 0.0, %v1940
        %1942 = vmatmul.f32.gmra.mxu0 %v1921
        %v1943 = vpop.f32.mrf.mxu0
        %v1944 = vadd.f32 0.0, %v1943
        %1945 = vdwg.mxu0
        %1946 = vst.msk [vmem:[%s325] sm:$0xff] %vm341, %v1941
        %1947 = vst.msk [vmem:[%s325 + $0x8] sm:$0xff] %vm341, %v1944
        %s1948 = sand.u32 %s225, 1
        %s1949 = scalar_lea.sflag [#allocation5], %s1948
        %s1950 = sand.u32 %s225, 1
        %s1951 = smul.addr %s1950, 16
        %s1952 = scalar_lea.vmem [#allocation4], %s1951
        // Predicated region
        $region57: #{mamba2_block_forward.1} parent=55 // pred_check
          %p1953 = pneg %p235
        $region58: #{mamba2_block_forward.1} parent=55 // pred_check_branch
          %1955 = sbr.rel (%p1953) target = $region60
        $region59: #{mamba2_block_forward.1} parent=55 // pred_region
          %1957 = vsyncadd %s1949, 0
          %s1958 = smul.addr %s23, 2
          %s1959 = smul.addr %s1958, 8
          %s1960 = scalar_lea.hbm %s9, %s1959
          %s1961 = sshll.u32 %s1952, 4
          %s1962 = int_to_ptr.vmem [resolvable:$true] %s1961
          %s1963 = sshll.u32 %s1960, 4
          %s1964 = int_to_ptr.hbm [resolvable:$true] %s1963
          %1969 = dma.vmem_to_hbm [thread:$0]  %s1962, 256, %s1964, %s1949, 128, 128, 8
        $region60: #{mamba2_block_forward.1} parent=55 // pred_fallthru
          _
      $region56: #{mamba2_block_forward.1} parent=5 // pred_fallthru
        _
      %p1970 = scmp.le.s32.totalorder 2, %s18
      // Predicated region
      $region61: #{mamba2_block_forward.1} parent=5 // pred_check
        %p1971 = pneg %p1970
      $region62: #{mamba2_block_forward.1} parent=5 // pred_check_branch
        %1973 = sbr.rel (%p1971) target = $region64
      $region63: #{mamba2_block_forward.1} parent=5 // pred_region
        %s1974 = ssub.s32 %s18, 2
        // Predicated region
        $region65: #{mamba2_block_forward.1} parent=63 // pred_check
          %p1975 = pneg %p241
        $region66: #{mamba2_block_forward.1} parent=63 // pred_check_branch
          %1977 = sbr.rel (%p1975) target = $region68
        $region67: #{mamba2_block_forward.1} parent=63 // pred_region
          %s1978 = sand.u32 %s226, 1
          %s1979 = scalar_lea.sflag [#allocation5], %s1978
          %s1980 = sand.u32 %s226, 1
          %s1981 = smul.addr %s1980, 16
          %s1982 = scalar_lea.vmem [#allocation4], %s1981
          %1984 = dma.done %s1979, 256
        $region68: #{mamba2_block_forward.1} parent=63 // pred_fallthru
          _
      $region64: #{mamba2_block_forward.1} parent=5 // pred_fallthru
        _
    $region6: #{mamba2_block_forward.1} parent=1 // loop_footer
      %s22 = sadd.s32 1, %s18
    $region7: #{mamba2_block_forward.1} parent=1 // loop_footer_branch
      %17 = sbr.rel target = $region3
    $region8: #{mamba2_block_forward.1} parent=1 // loop_exit
      _
    %1985 = vsyncpa [#allocation5], 1
    %s1986 = scalar_lea.sflag [#allocation5], 1
    %1987 = vsyncpa %s1986, 1

</llo_original>
